<compile_context>
chip_gen: v7x
topology: tpu7x:2x2x1
jax: 0.10.0
libtpu: 0.0.40
codegen_flags: <defaults>
</compile_context>

<pallas_src>
import jax
import jax.numpy as jnp
from jax.experimental import pallas as pl
from jax.experimental.pallas import tpu as pltpu

_LANE = 128  # TPU lane width; last dims of stored tiles should be multiples of this.


def _round_up(x, m):
    return (x + m - 1) // m * m


def _vmem_capacity_bytes():
    """Per-core VMEM capacity; conservative (v7x) fallback if query fails."""
    try:
        cap = int(pltpu.get_tpu_info().vmem_capacity_bytes)
        if cap > 0:
            return cap
    except Exception:
        pass
    return 64 << 20


# --------------------------------------------------------------------------
# Kernels
# --------------------------------------------------------------------------
def _mlp_resident_kernel(x_ref, w1_ref, b1_ref, w2_ref, b2_ref, o_ref):
    """One [tile_n, dim_in] row tile through fc1 -> ReLU -> fc2 (weights resident)."""
    # In-kernel cast of x to the weight/compute dtype (no-op for f32 weights).
    x = x_ref[...].astype(w1_ref.dtype)
    h = jnp.dot(x, w1_ref[...], preferred_element_type=jnp.float32)
    # Bias + ReLU + cast in a single elementwise pass over h (lean on v5e's vst slot).
    h = jnp.maximum(h + b1_ref[...], 0.0).astype(w2_ref.dtype)
    out = jnp.dot(h, w2_ref[...], preferred_element_type=jnp.float32)
    o_ref[...] = (out + b2_ref[...]).astype(o_ref.dtype)


def _mlp_hidtiled_kernel(x_ref, w1_ref, b1_ref, w2_ref, b2_ref, o_ref, acc_ref):
    """Same math, dim_hid tiled along a second ('arbitrary') grid axis."""
    h_idx = pl.program_id(1)

    @pl.when(h_idx == 0)
    def _():
        acc_ref[...] = jnp.zeros_like(acc_ref)

    x = x_ref[...].astype(w1_ref.dtype)
    h = jnp.dot(x, w1_ref[...], preferred_element_type=jnp.float32)
    h = jnp.maximum(h + b1_ref[...], 0.0).astype(w2_ref.dtype)
    acc_ref[...] += jnp.dot(h, w2_ref[...], preferred_element_type=jnp.float32)

    @pl.when(h_idx == pl.num_programs(1) - 1)
    def _():
        o_ref[...] = (acc_ref[...] + b2_ref[...]).astype(o_ref.dtype)


# --------------------------------------------------------------------------
# One-time parameter preparation (hoisted out of the per-call forward)
# --------------------------------------------------------------------------
def prepare_params(w1, b1, w2, b2, *, compute_dtype=jnp.bfloat16):
    """Pad dim_hid / num_class up to lane multiples and cast weights once.
    w1: [dim_in, dim_hid], b1: [dim_hid], w2: [dim_hid, num_class], b2: [num_class].
    Padded hidden units see zero weights + zero bias (ReLU keeps them at 0);
    padded class columns are sliced off (or ignored) by the consumer."""
    dim_in, dim_hid = w1.shape
    num_class = w2.shape[1]
    hid_p = _round_up(dim_hid, _LANE)
    nc_p = _round_up(num_class, _LANE)
    cdt = jnp.dtype(compute_dtype)
    # TODO(synk): on v7x, fp8 weight storage (native bf16 x fp8 MXU) would halve
    # weight residency/DMA for very large dim_hid before hid-tiling kicks in.
    w1_p = jnp.pad(w1, ((0, 0), (0, hid_p - dim_hid))).astype(cdt)
    b1_p = jnp.pad(b1, (0, hid_p - dim_hid)).reshape(1, hid_p).astype(jnp.float32)
    w2_p = jnp.pad(w2, ((0, hid_p - dim_hid), (0, nc_p - num_class))).astype(cdt)
    b2_p = jnp.pad(b2, (0, nc_p - num_class)).reshape(1, nc_p).astype(jnp.float32)
    return {"w1": w1_p, "b1": b1_p, "w2": w2_p, "b2": b2_p, "num_class": num_class}


# --------------------------------------------------------------------------
# Forward
# --------------------------------------------------------------------------
def node_classification_forward(x, params, *, tile_n=None, tile_hid=None,
                                out_dtype=None, trim_output=True,
                                force_hid_tiling=False):
    """x: [N, dim_in] (native dtype; cast to the weight dtype happens in-kernel).
    Returns [N, num_class] if trim_output, else the lane-dense padded [N, nc_p]
    slab (preferred when the consumer can fold the class slice in)."""
    w1_p, b1_p, w2_p, b2_p = params["w1"], params["b1"], params["w2"], params["b2"]
    num_class = params["num_class"]
    N, dim_in = x.shape
    assert w1_p.shape[0] == dim_in
    hid_p = w1_p.shape[1]
    nc_p = w2_p.shape[1]
    out_dtype = jnp.dtype(out_dtype) if out_dtype is not None else x.dtype

    x_itm = jnp.dtype(x.dtype).itemsize
    c_itm = jnp.dtype(w1_p.dtype).itemsize
    o_itm = jnp.dtype(out_dtype).itemsize

    vmem_cap = _vmem_capacity_bytes()
    # Generation-aware scoped-VMEM budget: leave headroom below per-core capacity.
    vmem_limit = int(min(max(vmem_cap - (16 << 20), vmem_cap * 3 // 4), 100 << 20))
    vmem_limit = max(vmem_limit, 32 << 20)

    # Row tile: 512 on 128-MiB-VMEM parts (v5e/v6e), 256 on v7x; shrink for small
    # N so the ('parallel') row grid has >= ~4 steps (megacore balance + pipelining).
    if tile_n is None:
        tile_n = 512 if vmem_cap >= (100 << 20) else 256
    tile_n = min(int(tile_n), max(_LANE, _round_up(pl.cdiv(N, 4), _LANE)))
    tile_n = max(8, _round_up(tile_n, 8))
    n_steps = pl.cdiv(N, tile_n)  # ragged N handled by masked edge block, no jnp.pad

    def _resident_bytes():
        weights = (dim_in * hid_p + hid_p * nc_p) * c_itm      # Buffered(1): one copy
        biases = (hid_p + nc_p) * 4
        x_tiles = 2 * tile_n * dim_in * x_itm                  # double-buffered
        o_tiles = 2 * tile_n * nc_p * o_itm
        interm = tile_n * (hid_p + nc_p) * 4                   # f32 intermediates
        return weights + biases + x_tiles + o_tiles + interm

    use_hid_tiling = force_hid_tiling or (2 * _resident_bytes() + (4 << 20) > vmem_limit)

    if not use_hid_tiling:
        # ---- resident-weights path (single grid axis over rows) ----
        def _call(single_buffer_weights):
            def wspec(shape):
                if single_buffer_weights:
                    return pl.BlockSpec(shape, lambda i: (0, 0),
                                        pipeline_mode=pl.Buffered(1))
                return pl.BlockSpec(shape, lambda i: (0, 0))

            return pl.pallas_call(
                _mlp_resident_kernel,
                out_shape=jax.ShapeDtypeStruct((N, nc_p), out_dtype),
                grid_spec=pltpu.PrefetchScalarGridSpec(
                    num_scalar_prefetch=0,
                    grid=(n_steps,),
                    in_specs=[
                        pl.BlockSpec((tile_n, dim_in), lambda i: (i, 0)),  # x row tile
                        wspec((dim_in, hid_p)),                            # w1 resident
                        wspec((1, hid_p)),                                 # b1 resident
                        wspec((hid_p, nc_p)),                              # w2 resident
                        wspec((1, nc_p)),                                  # b2 resident
                    ],
                    out_specs=pl.BlockSpec((tile_n, nc_p), lambda i: (i, 0)),
                ),
                compiler_params=pltpu.CompilerParams(
                    dimension_semantics=("parallel",),
                    vmem_limit_bytes=vmem_limit,
                ),
            )(x, w1_p, b1_p, w2_p, b2_p)

        try:
            out = _call(True)
        except Exception:
            # pipeline_mode=Buffered(1) not supported on this jax version:
            # fall back to default (double) buffering of the resident operands.
            out = _call(False)
    else:
        # ---- hid-tiled path (second, 'arbitrary', reduction axis over dim_hid) ----
        if tile_hid is None:
            per_hid = (dim_in + nc_p) * c_itm * 2 + 8 + tile_n * 4
            fixed = nc_p * 8 + 2 * tile_n * dim_in * x_itm \
                + 2 * tile_n * nc_p * o_itm + tile_n * nc_p * 4
            budget = max(vmem_limit // 2 - fixed - (2 << 20), 0)
            tile_hid = max(_LANE, min(hid_p, (budget // per_hid) // _LANE * _LANE))
        else:
            tile_hid = min(max(_LANE, _round_up(int(tile_hid), _LANE)), hid_p)
        # tile_hid must divide hid_p (no OOB reads on the reduction axis);
        # hid_p is a multiple of 128, so this terminates at worst at 128.
        while hid_p % tile_hid:
            tile_hid -= _LANE

        out = pl.pallas_call(
            _mlp_hidtiled_kernel,
            out_shape=jax.ShapeDtypeStruct((N, nc_p), out_dtype),
            grid_spec=pltpu.PrefetchScalarGridSpec(
                num_scalar_prefetch=0,
                grid=(n_steps, hid_p // tile_hid),
                in_specs=[
                    pl.BlockSpec((tile_n, dim_in), lambda i, h: (i, 0)),   # x (revisited)
                    pl.BlockSpec((dim_in, tile_hid), lambda i, h: (0, h)),  # w1 tile
                    pl.BlockSpec((1, tile_hid), lambda i, h: (0, h)),       # b1 tile
                    pl.BlockSpec((tile_hid, nc_p), lambda i, h: (h, 0)),    # w2 tile
                    pl.BlockSpec((1, nc_p), lambda i, h: (0, 0)),           # b2
                ],
                out_specs=pl.BlockSpec((tile_n, nc_p), lambda i, h: (i, 0)),
                scratch_shapes=[pltpu.VMEM((tile_n, nc_p), jnp.float32)],
            ),
            compiler_params=pltpu.CompilerParams(
                dimension_semantics=("parallel", "arbitrary"),
                vmem_limit_bytes=vmem_limit,
            ),
        )(x, w1_p, b1_p, w2_p, b2_p)

    if trim_output:
        out = out[:, :num_class]
    return out


def init_params(key, dim_in, dim_hid, num_class, dtype=jnp.float32):
    """Deterministic init mirroring torch.nn.Linear defaults
    (uniform(-1/sqrt(fan_in), 1/sqrt(fan_in))). Weights stored as [in, out]."""
    k1, k2, k3, k4 = jax.random.split(key, 4)
    bound1 = 1.0 / (dim_in ** 0.5)
    bound2 = 1.0 / (dim_hid ** 0.5)
    w1 = jax.random.uniform(k1, (dim_in, dim_hid), dtype, -bound1, bound1)
    b1 = jax.random.uniform(k2, (dim_hid,), dtype, -bound1, bound1)
    w2 = jax.random.uniform(k3, (dim_hid, num_class), dtype, -bound2, bound2)
    b2 = jax.random.uniform(k4, (num_class,), dtype, -bound2, bound2)
    return w1, b1, w2, b2


if __name__ == "__main__":
    key = jax.random.PRNGKey(0)
    k_x, k_p = jax.random.split(key)

    # Small shapes exercising ragged N and lane padding:
    # N=500 (not a tile multiple), dim_in=96, dim_hid=200 (->256), num_class=10 (->128).
    N, dim_in, dim_hid, num_class = 500, 96, 200, 10
    x = jax.random.normal(k_x, (N, dim_in), dtype=jnp.float32)
    w1, b1, w2, b2 = init_params(k_p, dim_in, dim_hid, num_class)

    # Plain-JAX reference (same math as the PyTorch module).
    ref = jnp.maximum(x @ w1 + b1, 0.0) @ w2 + b2

    # f32 compute, resident-weights path: strict check.
    params_f32 = prepare_params(w1, b1, w2, b2, compute_dtype=jnp.float32)
    out_f32 = jax.block_until_ready(node_classification_forward(x, params_f32))
    assert out_f32.shape == (N, num_class)
    assert jnp.allclose(out_f32, ref, atol=1e-3, rtol=1e-3)

    # bf16 weights with in-kernel x cast (fast path on v6e/v7x): loose check.
    params_bf16 = prepare_params(w1, b1, w2, b2, compute_dtype=jnp.bfloat16)
    out_bf16 = jax.block_until_ready(node_classification_forward(x, params_bf16))
    assert out_bf16.shape == (N, num_class)
    assert jnp.allclose(out_bf16, ref, atol=5e-2, rtol=5e-2)

    # Forced hid-tiled fallback path (used when weights don't fit resident in VMEM).
    out_tiled = jax.block_until_ready(
        node_classification_forward(x, params_f32, force_hid_tiling=True, tile_hid=128))
    assert out_tiled.shape == (N, num_class)
    assert jnp.allclose(out_tiled, ref, atol=1e-3, rtol=1e-3)

    # Lane-dense padded slab (consumer folds the class slice in itself).
    out_pad = jax.block_until_ready(
        node_classification_forward(x, params_f32, trim_output=False))
    assert out_pad.shape[0] == N and out_pad.shape[1] % 128 == 0
    assert jnp.allclose(out_pad[:, :num_class], ref, atol=1e-3, rtol=1e-3)

    print("KERNEL_OK")
</pallas_src>

<mosaic_0001>
module attributes {stable_mosaic.version = 11 : i64} {
  func.func @_mlp_resident_kernel(%arg0: i32, %arg1: memref<128x96xf32, #tpu.memory_space<vmem>>, %arg2: memref<96x256xf32, #tpu.memory_space<vmem>>, %arg3: memref<1x256xf32, #tpu.memory_space<vmem>>, %arg4: memref<256x128xf32, #tpu.memory_space<vmem>>, %arg5: memref<1x128xf32, #tpu.memory_space<vmem>>, %arg6: memref<128x128xf32, #tpu.memory_space<vmem>>) attributes {dimension_semantics = [#tpu.dimension_semantics<parallel>], iteration_bounds = array<i64: 4>, scalar_prefetch = 0 : i64, scratch_operands = 0 : i64, tpu.core_type = #tpu.core_type<tc>, window_params = [{transform_indices = @transform_0, window_bounds = array<i64: 128, 96>}, {pipeline_mode = #tpu.pipeline_mode<synchronous>, transform_indices = @transform_1, window_bounds = array<i64: 96, 256>}, {pipeline_mode = #tpu.pipeline_mode<synchronous>, transform_indices = @transform_2, window_bounds = array<i64: 1, 256>}, {pipeline_mode = #tpu.pipeline_mode<synchronous>, transform_indices = @transform_3, window_bounds = array<i64: 256, 128>}, {pipeline_mode = #tpu.pipeline_mode<synchronous>, transform_indices = @transform_4, window_bounds = array<i64: 1, 128>}, {transform_indices = @transform_5, window_bounds = array<i64: 128, 128>}]} {
    %c0 = arith.constant 0 : index
    %c0_0 = arith.constant 0 : index
    %0 = vector.load %arg1[%c0, %c0_0] : memref<128x96xf32, #tpu.memory_space<vmem>>, vector<128x96xf32>
    %c0_1 = arith.constant 0 : index
    %c0_2 = arith.constant 0 : index
    %1 = vector.load %arg2[%c0_1, %c0_2] : memref<96x256xf32, #tpu.memory_space<vmem>>, vector<96x256xf32>
    %cst = arith.constant dense<0.000000e+00> : vector<128x256xf32>
    %2 = tpu.matmul %0, %1, %cst {dimension_numbers = #tpu.dot_dimension_numbers<[1], [0], [0], [1], [0, 0, 1, 1], [], []>} : vector<128x96xf32>, vector<96x256xf32>, vector<128x256xf32> -> vector<128x256xf32>
    %c0_3 = arith.constant 0 : index
    %c0_4 = arith.constant 0 : index
    %3 = vector.load %arg3[%c0_3, %c0_4] : memref<1x256xf32, #tpu.memory_space<vmem>>, vector<1x256xf32>
    %4 = vector.broadcast %3 : vector<1x256xf32> to vector<128x256xf32>
    %5 = arith.addf %2, %4 : vector<128x256xf32>
    %cst_5 = arith.constant 0.000000e+00 : f32
    %6 = vector.broadcast %cst_5 : f32 to vector<128x256xf32>
    %7 = arith.maximumf %5, %6 : vector<128x256xf32>
    %c0_6 = arith.constant 0 : index
    %c0_7 = arith.constant 0 : index
    %8 = vector.load %arg4[%c0_6, %c0_7] : memref<256x128xf32, #tpu.memory_space<vmem>>, vector<256x128xf32>
    %cst_8 = arith.constant dense<0.000000e+00> : vector<128x128xf32>
    %9 = tpu.matmul %7, %8, %cst_8 {dimension_numbers = #tpu.dot_dimension_numbers<[1], [0], [0], [1], [0, 0, 1, 1], [], []>} : vector<128x256xf32>, vector<256x128xf32>, vector<128x128xf32> -> vector<128x128xf32>
    %c0_9 = arith.constant 0 : index
    %c0_10 = arith.constant 0 : index
    %10 = vector.load %arg5[%c0_9, %c0_10] : memref<1x128xf32, #tpu.memory_space<vmem>>, vector<1x128xf32>
    %11 = vector.broadcast %10 : vector<1x128xf32> to vector<128x128xf32>
    %12 = arith.addf %9, %11 : vector<128x128xf32>
    %c0_11 = arith.constant 0 : index
    %c0_12 = arith.constant 0 : index
    %13 = vector.load %arg6[%c0_11, %c0_12] : memref<128x128xf32, #tpu.memory_space<vmem>>, vector<128x128xf32>
    tpu.vector_store %arg6[%c0_11, %c0_12], %12 {strides = array<i32>} : memref<128x128xf32, #tpu.memory_space<vmem>>, vector<128x128xf32>,
    return
  }
  func.func @transform_0(%arg0: i32) -> (i32, i32) {
    %c0_i32 = arith.constant 0 : i32
    %c0_i32_0 = arith.constant 0 : i32
    return %arg0, %c0_i32 : i32, i32
  }
  func.func @transform_1(%arg0: i32) -> (i32, i32) {
    %c0_i32 = arith.constant 0 : i32
    %c0_i32_0 = arith.constant 0 : i32
    %c0_i32_1 = arith.constant 0 : i32
    return %c0_i32, %c0_i32_0 : i32, i32
  }
  func.func @transform_2(%arg0: i32) -> (i32, i32) {
    %c0_i32 = arith.constant 0 : i32
    %c0_i32_0 = arith.constant 0 : i32
    %c0_i32_1 = arith.constant 0 : i32
    return %c0_i32, %c0_i32_0 : i32, i32
  }
  func.func @transform_3(%arg0: i32) -> (i32, i32) {
    %c0_i32 = arith.constant 0 : i32
    %c0_i32_0 = arith.constant 0 : i32
    %c0_i32_1 = arith.constant 0 : i32
    return %c0_i32, %c0_i32_0 : i32, i32
  }
  func.func @transform_4(%arg0: i32) -> (i32, i32) {
    %c0_i32 = arith.constant 0 : i32
    %c0_i32_0 = arith.constant 0 : i32
    %c0_i32_1 = arith.constant 0 : i32
    return %c0_i32, %c0_i32_0 : i32, i32
  }
  func.func @transform_5(%arg0: i32) -> (i32, i32) {
    %c0_i32 = arith.constant 0 : i32
    %c0_i32_0 = arith.constant 0 : i32
    return %arg0, %c0_i32 : i32, i32
  }
}

module attributes {stable_mosaic.version = 11 : i64} {
  func.func @_mlp_resident_kernel(%arg0: i32, %arg1: memref<128x96xf32, #tpu.memory_space<vmem>>, %arg2: memref<96x256xf32, #tpu.memory_space<vmem>>, %arg3: memref<1x256xf32, #tpu.memory_space<vmem>>, %arg4: memref<256x128xf32, #tpu.memory_space<vmem>>, %arg5: memref<1x128xf32, #tpu.memory_space<vmem>>, %arg6: memref<128x128xf32, #tpu.memory_space<vmem>>) attributes {dimension_semantics = [#tpu.dimension_semantics<parallel>], iteration_bounds = array<i64: 4>, scalar_prefetch = 0 : i64, scratch_operands = 0 : i64, tpu.core_type = #tpu.core_type<tc>, window_params = [{transform_indices = @transform_0, window_bounds = array<i64: 128, 96>}, {pipeline_mode = #tpu.pipeline_mode<synchronous>, transform_indices = @transform_1, window_bounds = array<i64: 96, 256>}, {pipeline_mode = #tpu.pipeline_mode<synchronous>, transform_indices = @transform_2, window_bounds = array<i64: 1, 256>}, {pipeline_mode = #tpu.pipeline_mode<synchronous>, transform_indices = @transform_3, window_bounds = array<i64: 256, 128>}, {pipeline_mode = #tpu.pipeline_mode<synchronous>, transform_indices = @transform_4, window_bounds = array<i64: 1, 128>}, {transform_indices = @transform_5, window_bounds = array<i64: 128, 128>}]} {
    %c0 = arith.constant 0 : index
    %c0_0 = arith.constant 0 : index
    %0 = vector.load %arg1[%c0, %c0_0] : memref<128x96xf32, #tpu.memory_space<vmem>>, vector<128x96xf32>
    %c0_1 = arith.constant 0 : index
    %c0_2 = arith.constant 0 : index
    %1 = vector.load %arg2[%c0_1, %c0_2] : memref<96x256xf32, #tpu.memory_space<vmem>>, vector<96x256xf32>
    %cst = arith.constant dense<0.000000e+00> : vector<128x256xf32>
    %2 = tpu.matmul %0, %1, %cst {dimension_numbers = #tpu.dot_dimension_numbers<[1], [0], [0], [1], [0, 0, 1, 1], [], []>} : vector<128x96xf32>, vector<96x256xf32>, vector<128x256xf32> -> vector<128x256xf32>
    %c0_3 = arith.constant 0 : index
    %c0_4 = arith.constant 0 : index
    %3 = vector.load %arg3[%c0_3, %c0_4] : memref<1x256xf32, #tpu.memory_space<vmem>>, vector<1x256xf32>
    %4 = vector.broadcast %3 : vector<1x256xf32> to vector<128x256xf32>
    %5 = arith.addf %2, %4 : vector<128x256xf32>
    %cst_5 = arith.constant 0.000000e+00 : f32
    %6 = vector.broadcast %cst_5 : f32 to vector<128x256xf32>
    %7 = arith.maximumf %5, %6 : vector<128x256xf32>
    %c0_6 = arith.constant 0 : index
    %c0_7 = arith.constant 0 : index
    %8 = vector.load %arg4[%c0_6, %c0_7] : memref<256x128xf32, #tpu.memory_space<vmem>>, vector<256x128xf32>
    %cst_8 = arith.constant dense<0.000000e+00> : vector<128x128xf32>
    %9 = tpu.matmul %7, %8, %cst_8 {dimension_numbers = #tpu.dot_dimension_numbers<[1], [0], [0], [1], [0, 0, 1, 1], [], []>} : vector<128x256xf32>, vector<256x128xf32>, vector<128x128xf32> -> vector<128x128xf32>
    %c0_9 = arith.constant 0 : index
    %c0_10 = arith.constant 0 : index
    %10 = vector.load %arg5[%c0_9, %c0_10] : memref<1x128xf32, #tpu.memory_space<vmem>>, vector<1x128xf32>
    %11 = vector.broadcast %10 : vector<1x128xf32> to vector<128x128xf32>
    %12 = arith.addf %9, %11 : vector<128x128xf32>
    %c0_11 = arith.constant 0 : index
    %c0_12 = arith.constant 0 : index
    %13 = vector.load %arg6[%c0_11, %c0_12] : memref<128x128xf32, #tpu.memory_space<vmem>>, vector<128x128xf32>
    tpu.vector_store %arg6[%c0_11, %c0_12], %12 {strides = array<i32>} : memref<128x128xf32, #tpu.memory_space<vmem>>, vector<128x128xf32>,
    return
  }
  func.func @transform_0(%arg0: i32) -> (i32, i32) {
    %c0_i32 = arith.constant 0 : i32
    %c0_i32_0 = arith.constant 0 : i32
    return %arg0, %c0_i32 : i32, i32
  }
  func.func @transform_1(%arg0: i32) -> (i32, i32) {
    %c0_i32 = arith.constant 0 : i32
    %c0_i32_0 = arith.constant 0 : i32
    %c0_i32_1 = arith.constant 0 : i32
    return %c0_i32, %c0_i32_0 : i32, i32
  }
  func.func @transform_2(%arg0: i32) -> (i32, i32) {
    %c0_i32 = arith.constant 0 : i32
    %c0_i32_0 = arith.constant 0 : i32
    %c0_i32_1 = arith.constant 0 : i32
    return %c0_i32, %c0_i32_0 : i32, i32
  }
  func.func @transform_3(%arg0: i32) -> (i32, i32) {
    %c0_i32 = arith.constant 0 : i32
    %c0_i32_0 = arith.constant 0 : i32
    %c0_i32_1 = arith.constant 0 : i32
    return %c0_i32, %c0_i32_0 : i32, i32
  }
  func.func @transform_4(%arg0: i32) -> (i32, i32) {
    %c0_i32 = arith.constant 0 : i32
    %c0_i32_0 = arith.constant 0 : i32
    %c0_i32_1 = arith.constant 0 : i32
    return %c0_i32, %c0_i32_0 : i32, i32
  }
  func.func @transform_5(%arg0: i32) -> (i32, i32) {
    %c0_i32 = arith.constant 0 : i32
    %c0_i32_0 = arith.constant 0 : i32
    return %arg0, %c0_i32 : i32, i32
  }
}

</mosaic_0001>

<llo_original>
// kernel: tpu_custom_call.1
$region0: #{tpu_custom_call.1}
  #allocation0 [shape = 'u32[]', space=smem, size = 0x4, offset = 0x4, fixed_abs, tag = 'smem constant byte address 0x4 - core index']
  #allocation1 [shape = 'u32[144,128]{1,0:T(1,128)}', space=vmem, size = 0x12000, scoped, tag = 'internal scratch']
  %s0 = inlined_call_operand.vmem [shape: f32[500,96], index: 0, kind: input, shape index: {}]
  %s1 = inlined_call_operand.vmem [shape: f32[96,256], index: 1, kind: input, shape index: {}]
  %s2 = inlined_call_operand.vmem [shape: f32[1,256], index: 2, kind: input, shape index: {}]
  %s3 = inlined_call_operand.vmem [shape: f32[256,128], index: 3, kind: input, shape index: {}]
  %s4 = inlined_call_operand.vmem [shape: f32[1,128], index: 4, kind: input, shape index: {}]
  %s5 = inlined_call_operand.hbm [shape: f32[500,128], index: 5, kind: output, shape index: {}]
  %s6 = sld [smem:[#allocation0]]
  $region53: #{tpu_custom_call.1} parent=0
    _
  %s8 = ssub.s32 1, %s6
  %s9 = scalar_select 0, %s8, %s6
  $region1: #{tpu_custom_call.1} parent=0
    #allocation2 [shape = 'u8[131072]{0}', space=vmem, size = 0x20000, scoped, tag = 'output window, operand 0']
    #allocation3 [shape = 's32[2]{0}', space=sflag, size = 0x8, scoped, tag = 'scoped memory for tpu_custom_call.1']
    %10 = vsyncpa [#allocation3], 0
    %s11 = scalar_lea.sflag [#allocation3], 1
    %12 = vsyncpa %s11, 0
    loop: start=0, step=1, limit=6
    $region2: #{tpu_custom_call.1} parent=1 // loop_pre_header
      _
    $region3: #{tpu_custom_call.1} parent=1 // loop_header
      %s14 = sphi 0, %s18
      %p15 = scmp.ge.s32.totalorder %s14, 6
      %s24 = sphi 0, %s26
      %s27 = sphi 0, %s24
      %s28 = sphi 0, %s27
      %s44 = sphi 0, %s28
      %s48 = sphi 0, %s48
      %s50 = sphi 0, %s48
      %s51 = sphi 0, %s50
      %s65 = sphi 0, %s51
      %s69 = sphi 0, %s69
      %s71 = sphi 0, %s69
      %s72 = sphi 0, %s71
      %s86 = sphi 0, %s72
      %s90 = sphi 0, %s90
      %s92 = sphi 0, %s90
      %s93 = sphi 0, %s92
      %s107 = sphi 0, %s93
      %s111 = sphi 0, %s111
      %s113 = sphi 0, %s111
      %s114 = sphi 0, %s113
      %s128 = sphi 0, %s114
      %s134 = sphi 0, %s136
      %s137 = sphi 0, %s134
      %s138 = sphi 0, %s137
      %s154 = sphi 0, %s138
    $region4: #{tpu_custom_call.1} parent=1 // loop_header_branch
      %17 = sbr.rel (%p15) target = $region8
    $region5: #{tpu_custom_call.1} parent=1 // loop_body
      %s19 = ssub.s32 %s14, 1
      %s20 = ssub.s32 %s14, 2
      %s21 = sadd.s32 %s14, 1
      %s22 = ssub.s32 %s14, %s21
      %p23 = scmp.eq.s32.totalorder %s22, 0
      %s25 = sadd.s32 %s24, 1
      %s26 = scalar_select %p23, %s24, %s25
      %p29 = pneg %p23
      %p30 = scmp.eq.s32.totalorder %s14, 3
      %p31 = por %p29, %p30
      %p32 = scmp.ne.s32.totalorder %s24, %s27
      %p33 = scmp.eq.s32.totalorder %s14, 0
      %p34 = por %p32, %p33
      %p35 = scmp.ne.s32.totalorder %s24, %s27
      %p36 = scmp.eq.s32.totalorder %s19, 3
      %p37 = por %p35, %p36
      %p38 = scmp.ne.s32.totalorder %s27, %s28
      %p39 = scmp.eq.s32.totalorder %s19, 0
      %p40 = por %p38, %p39
      %p41 = scmp.ne.s32.totalorder %s27, %s28
      %p42 = scmp.eq.s32.totalorder %s20, 3
      %p43 = por %p41, %p42
      %p45 = scmp.ne.s32.totalorder %s28, %s44
      %p46 = scmp.eq.s32.totalorder %s20, 0
      %p47 = por %p45, %p46
      %s49 = sadd.s32 %s48, 1
      %p52 = scmp.eq.s32.totalorder %s14, 3
      %p53 = scmp.ne.s32.totalorder %s48, %s50
      %p54 = scmp.eq.s32.totalorder %s14, 0
      %p55 = por %p53, %p54
      %p56 = scmp.ne.s32.totalorder %s48, %s50
      %p57 = scmp.eq.s32.totalorder %s19, 3
      %p58 = por %p56, %p57
      %p59 = scmp.ne.s32.totalorder %s50, %s51
      %p60 = scmp.eq.s32.totalorder %s19, 0
      %p61 = por %p59, %p60
      %p62 = scmp.ne.s32.totalorder %s50, %s51
      %p63 = scmp.eq.s32.totalorder %s20, 3
      %p64 = por %p62, %p63
      %p66 = scmp.ne.s32.totalorder %s51, %s65
      %p67 = scmp.eq.s32.totalorder %s20, 0
      %p68 = por %p66, %p67
      %s70 = sadd.s32 %s69, 1
      %p73 = scmp.eq.s32.totalorder %s14, 3
      %p74 = scmp.ne.s32.totalorder %s69, %s71
      %p75 = scmp.eq.s32.totalorder %s14, 0
      %p76 = por %p74, %p75
      %p77 = scmp.ne.s32.totalorder %s69, %s71
      %p78 = scmp.eq.s32.totalorder %s19, 3
      %p79 = por %p77, %p78
      %p80 = scmp.ne.s32.totalorder %s71, %s72
      %p81 = scmp.eq.s32.totalorder %s19, 0
      %p82 = por %p80, %p81
      %p83 = scmp.ne.s32.totalorder %s71, %s72
      %p84 = scmp.eq.s32.totalorder %s20, 3
      %p85 = por %p83, %p84
      %p87 = scmp.ne.s32.totalorder %s72, %s86
      %p88 = scmp.eq.s32.totalorder %s20, 0
      %p89 = por %p87, %p88
      %s91 = sadd.s32 %s90, 1
      %p94 = scmp.eq.s32.totalorder %s14, 3
      %p95 = scmp.ne.s32.totalorder %s90, %s92
      %p96 = scmp.eq.s32.totalorder %s14, 0
      %p97 = por %p95, %p96
      %p98 = scmp.ne.s32.totalorder %s90, %s92
      %p99 = scmp.eq.s32.totalorder %s19, 3
      %p100 = por %p98, %p99
      %p101 = scmp.ne.s32.totalorder %s92, %s93
      %p102 = scmp.eq.s32.totalorder %s19, 0
      %p103 = por %p101, %p102
      %p104 = scmp.ne.s32.totalorder %s92, %s93
      %p105 = scmp.eq.s32.totalorder %s20, 3
      %p106 = por %p104, %p105
      %p108 = scmp.ne.s32.totalorder %s93, %s107
      %p109 = scmp.eq.s32.totalorder %s20, 0
      %p110 = por %p108, %p109
      %s112 = sadd.s32 %s111, 1
      %p115 = scmp.eq.s32.totalorder %s14, 3
      %p116 = scmp.ne.s32.totalorder %s111, %s113
      %p117 = scmp.eq.s32.totalorder %s14, 0
      %p118 = por %p116, %p117
      %p119 = scmp.ne.s32.totalorder %s111, %s113
      %p120 = scmp.eq.s32.totalorder %s19, 3
      %p121 = por %p119, %p120
      %p122 = scmp.ne.s32.totalorder %s113, %s114
      %p123 = scmp.eq.s32.totalorder %s19, 0
      %p124 = por %p122, %p123
      %p125 = scmp.ne.s32.totalorder %s113, %s114
      %p126 = scmp.eq.s32.totalorder %s20, 3
      %p127 = por %p125, %p126
      %p129 = scmp.ne.s32.totalorder %s114, %s128
      %p130 = scmp.eq.s32.totalorder %s20, 0
      %p131 = por %p129, %p130
      %s132 = ssub.s32 %s14, %s21
      %p133 = scmp.eq.s32.totalorder %s132, 0
      %s135 = sadd.s32 %s134, 1
      %s136 = scalar_select %p133, %s134, %s135
      %p139 = pneg %p133
      %p140 = scmp.eq.s32.totalorder %s14, 3
      %p141 = por %p139, %p140
      %p142 = scmp.ne.s32.totalorder %s134, %s137
      %p143 = scmp.eq.s32.totalorder %s14, 0
      %p144 = por %p142, %p143
      %p145 = scmp.ne.s32.totalorder %s134, %s137
      %p146 = scmp.eq.s32.totalorder %s19, 3
      %p147 = por %p145, %p146
      %p148 = scmp.ne.s32.totalorder %s137, %s138
      %p149 = scmp.eq.s32.totalorder %s19, 0
      %p150 = por %p148, %p149
      %p151 = scmp.ne.s32.totalorder %s137, %s138
      %p152 = scmp.eq.s32.totalorder %s20, 3
      %p153 = por %p151, %p152
      %p155 = scmp.ne.s32.totalorder %s138, %s154
      %p156 = scmp.eq.s32.totalorder %s20, 0
      %p157 = por %p155, %p156
      %p158 = scmp.le.s32.totalorder 1, %s14
      %p159 = scmp.lt.s32.totalorder %s14, 5
      %p160 = pnand %p158, %p159
      %p161 = pneg %p160
      // Predicated region
      $region9: #{tpu_custom_call.1} parent=5 // pred_check
        _
      $region10: #{tpu_custom_call.1} parent=5 // pred_check_branch
        %163 = sbr.rel (%p160) target = $region12
      $region11: #{tpu_custom_call.1} parent=5 // pred_region
        %s164 = ssub.s32 %s14, 1
        // Predicated region
        $region13: #{tpu_custom_call.1} parent=11 // pred_check
          %p165 = pneg %p61
        $region14: #{tpu_custom_call.1} parent=11 // pred_check_branch
          %167 = sbr.rel (%p165) target = $region16
        $region15: #{tpu_custom_call.1} parent=11 // pred_region
          _
        $region16: #{tpu_custom_call.1} parent=11 // pred_fallthru
          _
        // Predicated region
        $region17: #{tpu_custom_call.1} parent=11 // pred_check
          %p168 = pneg %p82
        $region18: #{tpu_custom_call.1} parent=11 // pred_check_branch
          %170 = sbr.rel (%p168) target = $region20
        $region19: #{tpu_custom_call.1} parent=11 // pred_region
          _
        $region20: #{tpu_custom_call.1} parent=11 // pred_fallthru
          _
        // Predicated region
        $region21: #{tpu_custom_call.1} parent=11 // pred_check
          %p171 = pneg %p103
        $region22: #{tpu_custom_call.1} parent=11 // pred_check_branch
          %173 = sbr.rel (%p171) target = $region24
        $region23: #{tpu_custom_call.1} parent=11 // pred_region
          _
        $region24: #{tpu_custom_call.1} parent=11 // pred_fallthru
          _
        // Predicated region
        $region25: #{tpu_custom_call.1} parent=11 // pred_check
          %p174 = pneg %p124
        $region26: #{tpu_custom_call.1} parent=11 // pred_check_branch
          %176 = sbr.rel (%p174) target = $region28
        $region27: #{tpu_custom_call.1} parent=11 // pred_region
          _
        $region28: #{tpu_custom_call.1} parent=11 // pred_fallthru
          _
      $region12: #{tpu_custom_call.1} parent=5 // pred_fallthru
        _
      %p177 = scmp.lt.s32.totalorder %s14, 4
      // Predicated region
      $region29: #{tpu_custom_call.1} parent=5 // pred_check
        %p178 = pneg %p177
      $region30: #{tpu_custom_call.1} parent=5 // pred_check_branch
        %180 = sbr.rel (%p178) target = $region32
      $region31: #{tpu_custom_call.1} parent=5 // pred_region
        // Predicated region
        $region33: #{tpu_custom_call.1} parent=31 // pred_check
          %p181 = pneg %p34
        $region34: #{tpu_custom_call.1} parent=31 // pred_check_branch
          %183 = sbr.rel (%p181) target = $region36
        $region35: #{tpu_custom_call.1} parent=31 // pred_region
          %s184 = smul.u32 16, %s14
          %s185 = ssub.s32 63, %s184
          %p186 = scmp.lt.s32.totalorder %s185, 16
          %s187 = scalar_select %p186, %s185, 16
          %s188 = smul.u32 128, %s187
          %p189 = scmp.lt.s32.totalorder %s184, 62
          %s190 = scalar_select %p189, %s184, 62
          %s191 = smul.addr %s190, 8
          %s192 = scalar_lea.vmem %s0, %s191
          %s193 = smul.u32 16, %s14
          %s194 = ssub.s32 63, %s193
          %p195 = scmp.lt.s32.totalorder %s194, 16
          %s196 = scalar_select %p195, %s194, 16
          %s197 = smul.u32 128, %s196
        $region36: #{tpu_custom_call.1} parent=31 // pred_fallthru
          _
      $region32: #{tpu_custom_call.1} parent=5 // pred_fallthru
        _
      %p198 = scmp.le.s32.totalorder 1, %s14
      %p199 = scmp.lt.s32.totalorder %s14, 5
      %p200 = pnand %p198, %p199
      %p201 = pneg %p200
      // Predicated region
      $region37: #{tpu_custom_call.1} parent=5 // pred_check
        _
      $region38: #{tpu_custom_call.1} parent=5 // pred_check_branch
        %203 = sbr.rel (%p200) target = $region40
      $region39: #{tpu_custom_call.1} parent=5 // pred_region
        %s204 = ssub.s32 %s14, 1
        %s205 = smul.u32 16, %s19
        %s206 = ssub.s32 63, %s205
        %p207 = scmp.lt.s32.totalorder %s206, 16
        %s208 = scalar_select %p207, %s206, 16
        %s209 = smul.u32 128, %s208
        %p210 = scmp.lt.s32.totalorder %s205, 62
        %s211 = scalar_select %p210, %s205, 62
        %s212 = smul.addr %s211, 8
        %s213 = scalar_lea.vmem %s0, %s212
        %p214 = pneg %p40
        %p215 = pneg %p37
        %p216 = pneg %p61
        %p217 = pneg %p58
        %p218 = pneg %p82
        %p219 = pneg %p79
        %p220 = pneg %p103
        %p221 = pneg %p100
        %p222 = pneg %p124
        %p223 = pneg %p121
        %p224 = pneg %p150
        %p225 = pneg %p147
        %s226 = sand.u32 %s137, 1
        %s227 = scalar_lea.sflag [#allocation3], %s226
        %s228 = sand.u32 %s137, 1
        %s229 = smul.addr %s228, 128
        %s230 = scalar_lea.vmem [#allocation2], %s229
        %s231 = smul.u32 16, %s19
        %s232 = ssub.s32 63, %s231
        %p233 = scmp.lt.s32.totalorder %s232, 16
        %s234 = scalar_select %p233, %s232, 16
        %s235 = smul.u32 128, %s234
        %p236 = scmp.lt.s32.totalorder %s231, 62
        %s237 = scalar_select %p236, %s231, 62
        %s238 = smul.addr %s237, 8
        %s239 = scalar_lea.vmem %s0, %s238
        %s240 = smul.u32 16, %s19
        %s241 = ssub.s32 63, %s240
        %p242 = scmp.lt.s32.totalorder %s241, 16
        %s243 = scalar_select %p242, %s241, 16
        %s244 = smul.u32 128, %s243
        %s245 = smul.u32 16, %s19
        %s246 = ssub.s32 63, %s245
        %p247 = scmp.lt.s32.totalorder %s246, 16
        %s248 = scalar_select %p247, %s246, 16
        %s249 = smul.u32 128, %s248
        %v250 = vld [vmem:[%s239] sm:$0xff]
        %v251 = vld [vmem:[%s239 + $0x8] sm:$0xff]
        %v252 = vld [vmem:[%s239 + $0x10] sm:$0xff]
        %v253 = vld [vmem:[%s239 + $0x18] sm:$0xff]
        %v254 = vld [vmem:[%s239 + $0x20] sm:$0xff]
        %v255 = vld [vmem:[%s239 + $0x28] sm:$0xff]
        %v256 = vld [vmem:[%s239 + $0x30] sm:$0xff]
        %v257 = vld [vmem:[%s239 + $0x38] sm:$0xff]
        %v258 = vld [vmem:[%s239 + $0x40] sm:$0xff]
        %v259 = vld [vmem:[%s239 + $0x48] sm:$0xff]
        %v260 = vld [vmem:[%s239 + $0x50] sm:$0xff]
        %v261 = vld [vmem:[%s239 + $0x58] sm:$0xff]
        %v262 = vld [vmem:[%s239 + $0x60] sm:$0xff]
        %v263 = vld [vmem:[%s239 + $0x68] sm:$0xff]
        %v264 = vld [vmem:[%s239 + $0x70] sm:$0xff]
        %v265 = vld [vmem:[%s239 + $0x78] sm:$0xff]
        %v266 = vld [vmem:[%s1] sm:$0xff]
        %v267 = vld [vmem:[%s1 + $0x8] sm:$0xff]
        %v268 = vld [vmem:[%s1 + $0x10] sm:$0xff]
        %v269 = vld [vmem:[%s1 + $0x18] sm:$0xff]
        %v270 = vld [vmem:[%s1 + $0x20] sm:$0xff]
        %v271 = vld [vmem:[%s1 + $0x28] sm:$0xff]
        %v272 = vld [vmem:[%s1 + $0x30] sm:$0xff]
        %v273 = vld [vmem:[%s1 + $0x38] sm:$0xff]
        %v274 = vld [vmem:[%s1 + $0x40] sm:$0xff]
        %v275 = vld [vmem:[%s1 + $0x48] sm:$0xff]
        %v276 = vld [vmem:[%s1 + $0x50] sm:$0xff]
        %v277 = vld [vmem:[%s1 + $0x58] sm:$0xff]
        %v278 = vld [vmem:[%s1 + $0x60] sm:$0xff]
        %v279 = vld [vmem:[%s1 + $0x68] sm:$0xff]
        %v280 = vld [vmem:[%s1 + $0x70] sm:$0xff]
        %v281 = vld [vmem:[%s1 + $0x78] sm:$0xff]
        %v282 = vld [vmem:[%s1 + $0x80] sm:$0xff]
        %v283 = vld [vmem:[%s1 + $0x88] sm:$0xff]
        %v284 = vld [vmem:[%s1 + $0x90] sm:$0xff]
        %v285 = vld [vmem:[%s1 + $0x98] sm:$0xff]
        %v286 = vld [vmem:[%s1 + $0xa0] sm:$0xff]
        %v287 = vld [vmem:[%s1 + $0xa8] sm:$0xff]
        %v288 = vld [vmem:[%s1 + $0xb0] sm:$0xff]
        %v289 = vld [vmem:[%s1 + $0xb8] sm:$0xff]
        %v290 = vld [vmem:[%s2] sm:$0x3]
        %v292 = vlaneseq
        %v293 = vshrl.u32 %v292, 7
        %v294 = vsub.s32 0, %v293
        %v295 = vrot.slane %v290, %v294
        %v296 = vlaneseq
        %v297 = vshrl.u32 %v296, 7
        %v298 = vsub.s32 1, %v297
        %v299 = vrot.slane %v290, %v298
        %vm302 = vcmask 785408
        %v304 = vsel %vm302, %v250, 0
        %v307 = vsel %vm302, %v251, 0
        %v310 = vsel %vm302, %v252, 0
        %v313 = vsel %vm302, %v253, 0
        %v316 = vsel %vm302, %v254, 0
        %v319 = vsel %vm302, %v255, 0
        %v322 = vsel %vm302, %v256, 0
        %v325 = vsel %vm302, %v257, 0
        %v328 = vsel %vm302, %v258, 0
        %v331 = vsel %vm302, %v259, 0
        %v334 = vsel %vm302, %v260, 0
        %v337 = vsel %vm302, %v261, 0
        %v340 = vsel %vm302, %v262, 0
        %v343 = vsel %vm302, %v263, 0
        %v346 = vsel %vm302, %v264, 0
        %v349 = vsel %vm302, %v265, 0
        %351 = vmatprep.subr.mxu0 %v267
        %352 = vmatpush1.msra.mxu0 %v266
        %353 = vmatprep.subr.mxu0 %v269
        %354 = vmatpush1.msra.mxu0 %v268
        %355 = vmatprep.subr.mxu0 %v271
        %356 = vmatpush1.msra.mxu0 %v270
        %357 = vmatprep.subr.mxu0 %v273
        %358 = vmatpush1.msra.mxu0 %v272
        %359 = vmatprep.subr.mxu0 %v275
        %360 = vmatpush1.msra.mxu0 %v274
        %361 = vmatprep.subr.mxu0 %v277
        %362 = vmatpush1.msra.mxu0 %v276
        %363 = vmatprep.subr.mxu0 %v279
        %364 = vmatpush1.msra.mxu0 %v278
        %365 = vmatprep.subr.mxu0 %v281
        %366 = vmatpush1.msra.mxu0 %v280
        %367 = vmatprep.subr.mxu0 %v283
        %368 = vmatpush1.msra.mxu0 %v282
        %369 = vmatprep.subr.mxu0 %v285
        %370 = vmatpush1.msra.mxu0 %v284
        %371 = vmatprep.subr.mxu0 %v287
        %372 = vmatpush1.msra.mxu0 %v286
        %373 = vmatprep.subr.mxu0 %v289
        %374 = vmatpush1.msra.mxu0 %v288
        %375 = vmatprep.subr.mxu0 0.0
        %376 = vmatpush1.msra.mxu0 0.0
        %377 = vmatprep.subr.mxu0 0.0
        %378 = vmatpush1.msra.mxu0 0.0
        %379 = vmatprep.subr.mxu0 0.0
        %380 = vmatpush1.msra.mxu0 0.0
        %381 = vmatprep.subr.mxu0 0.0
        %382 = vmatpush1.msra.mxu0 0.0
        %383 = vmatprep.subr.mxu0 0.0
        %384 = vmatpush1.msra.mxu0 0.0
        %385 = vmatprep.subr.mxu0 0.0
        %386 = vmatpush1.msra.mxu0 0.0
        %387 = vmatprep.subr.mxu0 0.0
        %388 = vmatpush1.msra.mxu0 0.0
        %389 = vmatprep.subr.mxu0 0.0
        %390 = vmatpush1.msra.mxu0 0.0
        %391 = vmatprep.subr.mxu0 0.0
        %392 = vmatpush1.msra.mxu0 0.0
        %393 = vmatprep.subr.mxu0 0.0
        %394 = vmatpush1.msra.mxu0 0.0
        %395 = vmatprep.subr.mxu0 0.0
        %396 = vmatpush1.msra.mxu0 0.0
        %397 = vmatprep.subr.mxu0 0.0
        %398 = vmatpush1.msra.mxu0 0.0
        %399 = vmatprep.subr.mxu0 0.0
        %400 = vmatpush1.msra.mxu0 0.0
        %401 = vmatprep.subr.mxu0 0.0
        %402 = vmatpush1.msra.mxu0 0.0
        %403 = vmatprep.subr.mxu0 0.0
        %404 = vmatpush1.msra.mxu0 0.0
        %405 = vmatprep.subr.mxu0 0.0
        %406 = vmatpush1.msra.mxu0 0.0
        %407 = vmatprep.subr.mxu0 0.0
        %408 = vmatpush1.msra.mxu0 0.0
        %409 = vmatprep.subr.mxu0 0.0
        %410 = vmatpush1.msra.mxu0 0.0
        %411 = vmatprep.subr.mxu0 0.0
        %412 = vmatpush1.msra.mxu0 0.0
        %413 = vmatprep.subr.mxu0 0.0
        %414 = vmatpush1.msra.mxu0 0.0
        %415 = vmatprep.mubr.f32.mxu0 0.0
        %416 = vmatmul.mubr.f32.gmra.mrb[0].mxu0 %v304
        %v417 = vpop.f32.mrb[0].mxu0
        %v418 = vadd.f32 %v295, %v417
        %v419 = vpop.f32.mrb[0].mxu0
        %v420 = vadd.f32 %v299, %v419
        %421 = vmatprep.mubr.f32.mxu0 0.0
        %422 = vmatmul.mubr.f32.gmra.mrb[0].mxu0 %v307
        %v423 = vpop.f32.mrb[0].mxu0
        %v424 = vadd.f32 %v295, %v423
        %v425 = vpop.f32.mrb[0].mxu0
        %v426 = vadd.f32 %v299, %v425
        %427 = vmatprep.mubr.f32.mxu0 0.0
        %428 = vmatmul.mubr.f32.gmra.mrb[0].mxu0 %v310
        %v429 = vpop.f32.mrb[0].mxu0
        %v430 = vadd.f32 %v295, %v429
        %v431 = vpop.f32.mrb[0].mxu0
        %v432 = vadd.f32 %v299, %v431
        %433 = vmatprep.mubr.f32.mxu0 0.0
        %434 = vmatmul.mubr.f32.gmra.mrb[0].mxu0 %v313
        %v435 = vpop.f32.mrb[0].mxu0
        %v436 = vadd.f32 %v295, %v435
        %v437 = vpop.f32.mrb[0].mxu0
        %v438 = vadd.f32 %v299, %v437
        %439 = vmatprep.mubr.f32.mxu0 0.0
        %440 = vmatmul.mubr.f32.gmra.mrb[0].mxu0 %v316
        %v441 = vpop.f32.mrb[0].mxu0
        %v442 = vadd.f32 %v295, %v441
        %v443 = vpop.f32.mrb[0].mxu0
        %v444 = vadd.f32 %v299, %v443
        %445 = vmatprep.mubr.f32.mxu0 0.0
        %446 = vmatmul.mubr.f32.gmra.mrb[0].mxu0 %v319
        %v447 = vpop.f32.mrb[0].mxu0
        %v448 = vadd.f32 %v295, %v447
        %v449 = vpop.f32.mrb[0].mxu0
        %v450 = vadd.f32 %v299, %v449
        %451 = vmatprep.mubr.f32.mxu0 0.0
        %452 = vmatmul.mubr.f32.gmra.mrb[0].mxu0 %v322
        %v453 = vpop.f32.mrb[0].mxu0
        %v454 = vadd.f32 %v295, %v453
        %v455 = vpop.f32.mrb[0].mxu0
        %v456 = vadd.f32 %v299, %v455
        %457 = vmatprep.mubr.f32.mxu0 0.0
        %458 = vmatmul.mubr.f32.gmra.mrb[0].mxu0 %v325
        %v459 = vpop.f32.mrb[0].mxu0
        %v460 = vadd.f32 %v295, %v459
        %v461 = vpop.f32.mrb[0].mxu0
        %v462 = vadd.f32 %v299, %v461
        %463 = vmatprep.mubr.f32.mxu0 0.0
        %464 = vmatmul.mubr.f32.gmra.mrb[0].mxu0 %v328
        %v465 = vpop.f32.mrb[0].mxu0
        %v466 = vadd.f32 %v295, %v465
        %v467 = vpop.f32.mrb[0].mxu0
        %v468 = vadd.f32 %v299, %v467
        %469 = vmatprep.mubr.f32.mxu0 0.0
        %470 = vmatmul.mubr.f32.gmra.mrb[0].mxu0 %v331
        %v471 = vpop.f32.mrb[0].mxu0
        %v472 = vadd.f32 %v295, %v471
        %v473 = vpop.f32.mrb[0].mxu0
        %v474 = vadd.f32 %v299, %v473
        %475 = vmatprep.mubr.f32.mxu0 0.0
        %476 = vmatmul.mubr.f32.gmra.mrb[0].mxu0 %v334
        %v477 = vpop.f32.mrb[0].mxu0
        %v478 = vadd.f32 %v295, %v477
        %v479 = vpop.f32.mrb[0].mxu0
        %v480 = vadd.f32 %v299, %v479
        %481 = vmatprep.mubr.f32.mxu0 0.0
        %482 = vmatmul.mubr.f32.gmra.mrb[0].mxu0 %v337
        %v483 = vpop.f32.mrb[0].mxu0
        %v484 = vadd.f32 %v295, %v483
        %v485 = vpop.f32.mrb[0].mxu0
        %v486 = vadd.f32 %v299, %v485
        %487 = vmatprep.mubr.f32.mxu0 0.0
        %488 = vmatmul.mubr.f32.gmra.mrb[0].mxu0 %v340
        %v489 = vpop.f32.mrb[0].mxu0
        %v490 = vadd.f32 %v295, %v489
        %v491 = vpop.f32.mrb[0].mxu0
        %v492 = vadd.f32 %v299, %v491
        %493 = vmatprep.mubr.f32.mxu0 0.0
        %494 = vmatmul.mubr.f32.gmra.mrb[0].mxu0 %v343
        %v495 = vpop.f32.mrb[0].mxu0
        %v496 = vadd.f32 %v295, %v495
        %v497 = vpop.f32.mrb[0].mxu0
        %v498 = vadd.f32 %v299, %v497
        %499 = vmatprep.mubr.f32.mxu0 0.0
        %500 = vmatmul.mubr.f32.gmra.mrb[0].mxu0 %v346
        %v501 = vpop.f32.mrb[0].mxu0
        %v502 = vadd.f32 %v295, %v501
        %v503 = vpop.f32.mrb[0].mxu0
        %v504 = vadd.f32 %v299, %v503
        %505 = vmatprep.mubr.f32.mxu0 0.0
        %506 = vmatmul.mubr.f32.gmra.mrb[0].mxu0 %v349
        %v507 = vpop.f32.mrb[0].mxu0
        %v508 = vadd.f32 %v295, %v507
        %v509 = vpop.f32.mrb[0].mxu0
        %v510 = vadd.f32 %v299, %v509
        %511 = vdwg.mxu0
        %v512 = vmax.f32 %v418, 0.0
        %v513 = vmax.f32 %v420, 0.0
        %v514 = vmax.f32 %v424, 0.0
        %v515 = vmax.f32 %v426, 0.0
        %v516 = vmax.f32 %v430, 0.0
        %v517 = vmax.f32 %v432, 0.0
        %v518 = vmax.f32 %v436, 0.0
        %v519 = vmax.f32 %v438, 0.0
        %v520 = vmax.f32 %v442, 0.0
        %v521 = vmax.f32 %v444, 0.0
        %v522 = vmax.f32 %v448, 0.0
        %v523 = vmax.f32 %v450, 0.0
        %v524 = vmax.f32 %v454, 0.0
        %v525 = vmax.f32 %v456, 0.0
        %v526 = vmax.f32 %v460, 0.0
        %v527 = vmax.f32 %v462, 0.0
        %v528 = vmax.f32 %v466, 0.0
        %v529 = vmax.f32 %v468, 0.0
        %v530 = vmax.f32 %v472, 0.0
        %v531 = vmax.f32 %v474, 0.0
        %v532 = vmax.f32 %v478, 0.0
        %v533 = vmax.f32 %v480, 0.0
        %v534 = vmax.f32 %v484, 0.0
        %v535 = vmax.f32 %v486, 0.0
        %v536 = vmax.f32 %v490, 0.0
        %v537 = vmax.f32 %v492, 0.0
        %v538 = vmax.f32 %v496, 0.0
        %v539 = vmax.f32 %v498, 0.0
        %v540 = vmax.f32 %v502, 0.0
        %v541 = vmax.f32 %v504, 0.0
        %v542 = vmax.f32 %v508, 0.0
        %v543 = vmax.f32 %v510, 0.0
        %v544 = vld [vmem:[%s3] sm:$0xff]
        %v545 = vld [vmem:[%s3 + $0x8] sm:$0xff]
        %v546 = vld [vmem:[%s3 + $0x10] sm:$0xff]
        %v547 = vld [vmem:[%s3 + $0x18] sm:$0xff]
        %v548 = vld [vmem:[%s3 + $0x20] sm:$0xff]
        %v549 = vld [vmem:[%s3 + $0x28] sm:$0xff]
        %v550 = vld [vmem:[%s3 + $0x30] sm:$0xff]
        %v551 = vld [vmem:[%s3 + $0x38] sm:$0xff]
        %v552 = vld [vmem:[%s3 + $0x40] sm:$0xff]
        %v553 = vld [vmem:[%s3 + $0x48] sm:$0xff]
        %v554 = vld [vmem:[%s3 + $0x50] sm:$0xff]
        %v555 = vld [vmem:[%s3 + $0x58] sm:$0xff]
        %v556 = vld [vmem:[%s3 + $0x60] sm:$0xff]
        %v557 = vld [vmem:[%s3 + $0x68] sm:$0xff]
        %v558 = vld [vmem:[%s3 + $0x70] sm:$0xff]
        %v559 = vld [vmem:[%s3 + $0x78] sm:$0xff]
        %v560 = vld [vmem:[%s3 + $0x80] sm:$0xff]
        %v561 = vld [vmem:[%s3 + $0x88] sm:$0xff]
        %v562 = vld [vmem:[%s3 + $0x90] sm:$0xff]
        %v563 = vld [vmem:[%s3 + $0x98] sm:$0xff]
        %v564 = vld [vmem:[%s3 + $0xa0] sm:$0xff]
        %v565 = vld [vmem:[%s3 + $0xa8] sm:$0xff]
        %v566 = vld [vmem:[%s3 + $0xb0] sm:$0xff]
        %v567 = vld [vmem:[%s3 + $0xb8] sm:$0xff]
        %v568 = vld [vmem:[%s3 + $0xc0] sm:$0xff]
        %v569 = vld [vmem:[%s3 + $0xc8] sm:$0xff]
        %v570 = vld [vmem:[%s3 + $0xd0] sm:$0xff]
        %v571 = vld [vmem:[%s3 + $0xd8] sm:$0xff]
        %v572 = vld [vmem:[%s3 + $0xe0] sm:$0xff]
        %v573 = vld [vmem:[%s3 + $0xe8] sm:$0xff]
        %v574 = vld [vmem:[%s3 + $0xf0] sm:$0xff]
        %v575 = vld [vmem:[%s3 + $0xf8] sm:$0xff]
        %v576 = vld [vmem:[%s4] sm:$0x1]
        %v578 = vlaneseq
        %v579 = vshrl.u32 %v578, 7
        %v580 = vsub.s32 0, %v579
        %v581 = vrot.slane %v576, %v580
        %583 = vmatprep.subr.mxu0 0.0
        %584 = vmatpush1.msra.mxu0 %v544
        %585 = vmatprep.subr.mxu0 0.0
        %586 = vmatpush1.msra.mxu0 %v545
        %587 = vmatprep.subr.mxu0 0.0
        %588 = vmatpush1.msra.mxu0 %v546
        %589 = vmatprep.subr.mxu0 0.0
        %590 = vmatpush1.msra.mxu0 %v547
        %591 = vmatprep.subr.mxu0 0.0
        %592 = vmatpush1.msra.mxu0 %v548
        %593 = vmatprep.subr.mxu0 0.0
        %594 = vmatpush1.msra.mxu0 %v549
        %595 = vmatprep.subr.mxu0 0.0
        %596 = vmatpush1.msra.mxu0 %v550
        %597 = vmatprep.subr.mxu0 0.0
        %598 = vmatpush1.msra.mxu0 %v551
        %599 = vmatprep.subr.mxu0 0.0
        %600 = vmatpush1.msra.mxu0 %v552
        %601 = vmatprep.subr.mxu0 0.0
        %602 = vmatpush1.msra.mxu0 %v553
        %603 = vmatprep.subr.mxu0 0.0
        %604 = vmatpush1.msra.mxu0 %v554
        %605 = vmatprep.subr.mxu0 0.0
        %606 = vmatpush1.msra.mxu0 %v555
        %607 = vmatprep.subr.mxu0 0.0
        %608 = vmatpush1.msra.mxu0 %v556
        %609 = vmatprep.subr.mxu0 0.0
        %610 = vmatpush1.msra.mxu0 %v557
        %611 = vmatprep.subr.mxu0 0.0
        %612 = vmatpush1.msra.mxu0 %v558
        %613 = vmatprep.subr.mxu0 0.0
        %614 = vmatpush1.msra.mxu0 %v559
        %615 = vmatprep.subr.mxu0 0.0
        %616 = vmatpush1.msra.mxu0 %v560
        %617 = vmatprep.subr.mxu0 0.0
        %618 = vmatpush1.msra.mxu0 %v561
        %619 = vmatprep.subr.mxu0 0.0
        %620 = vmatpush1.msra.mxu0 %v562
        %621 = vmatprep.subr.mxu0 0.0
        %622 = vmatpush1.msra.mxu0 %v563
        %623 = vmatprep.subr.mxu0 0.0
        %624 = vmatpush1.msra.mxu0 %v564
        %625 = vmatprep.subr.mxu0 0.0
        %626 = vmatpush1.msra.mxu0 %v565
        %627 = vmatprep.subr.mxu0 0.0
        %628 = vmatpush1.msra.mxu0 %v566
        %629 = vmatprep.subr.mxu0 0.0
        %630 = vmatpush1.msra.mxu0 %v567
        %631 = vmatprep.subr.mxu0 0.0
        %632 = vmatpush1.msra.mxu0 %v568
        %633 = vmatprep.subr.mxu0 0.0
        %634 = vmatpush1.msra.mxu0 %v569
        %635 = vmatprep.subr.mxu0 0.0
        %636 = vmatpush1.msra.mxu0 %v570
        %637 = vmatprep.subr.mxu0 0.0
        %638 = vmatpush1.msra.mxu0 %v571
        %639 = vmatprep.subr.mxu0 0.0
        %640 = vmatpush1.msra.mxu0 %v572
        %641 = vmatprep.subr.mxu0 0.0
        %642 = vmatpush1.msra.mxu0 %v573
        %643 = vmatprep.subr.mxu0 0.0
        %644 = vmatpush1.msra.mxu0 %v574
        %645 = vmatprep.subr.mxu0 0.0
        %646 = vmatpush1.msra.mxu0 %v575
        %647 = vmatprep.mubr.f32.mxu0 %v513
        %648 = vmatmul.mubr.f32.gmra.mrb[0].mxu0 %v512
        %v649 = vpop.f32.mrb[0].mxu0
        %v650 = vadd.f32 %v581, %v649
        %v651 = vpop.f32.mrb[0].mxu0
        %652 = vmatprep.mubr.f32.mxu0 %v515
        %653 = vmatmul.mubr.f32.gmra.mrb[0].mxu0 %v514
        %v654 = vpop.f32.mrb[0].mxu0
        %v655 = vadd.f32 %v581, %v654
        %v656 = vpop.f32.mrb[0].mxu0
        %657 = vmatprep.mubr.f32.mxu0 %v517
        %658 = vmatmul.mubr.f32.gmra.mrb[0].mxu0 %v516
        %v659 = vpop.f32.mrb[0].mxu0
        %v660 = vadd.f32 %v581, %v659
        %v661 = vpop.f32.mrb[0].mxu0
        %662 = vmatprep.mubr.f32.mxu0 %v519
        %663 = vmatmul.mubr.f32.gmra.mrb[0].mxu0 %v518
        %v664 = vpop.f32.mrb[0].mxu0
        %v665 = vadd.f32 %v581, %v664
        %v666 = vpop.f32.mrb[0].mxu0
        %667 = vmatprep.mubr.f32.mxu0 %v521
        %668 = vmatmul.mubr.f32.gmra.mrb[0].mxu0 %v520
        %v669 = vpop.f32.mrb[0].mxu0
        %v670 = vadd.f32 %v581, %v669
        %v671 = vpop.f32.mrb[0].mxu0
        %672 = vmatprep.mubr.f32.mxu0 %v523
        %673 = vmatmul.mubr.f32.gmra.mrb[0].mxu0 %v522
        %v674 = vpop.f32.mrb[0].mxu0
        %v675 = vadd.f32 %v581, %v674
        %v676 = vpop.f32.mrb[0].mxu0
        %677 = vmatprep.mubr.f32.mxu0 %v525
        %678 = vmatmul.mubr.f32.gmra.mrb[0].mxu0 %v524
        %v679 = vpop.f32.mrb[0].mxu0
        %v680 = vadd.f32 %v581, %v679
        %v681 = vpop.f32.mrb[0].mxu0
        %682 = vmatprep.mubr.f32.mxu0 %v527
        %683 = vmatmul.mubr.f32.gmra.mrb[0].mxu0 %v526
        %v684 = vpop.f32.mrb[0].mxu0
        %v685 = vadd.f32 %v581, %v684
        %v686 = vpop.f32.mrb[0].mxu0
        %687 = vmatprep.mubr.f32.mxu0 %v529
        %688 = vmatmul.mubr.f32.gmra.mrb[0].mxu0 %v528
        %v689 = vpop.f32.mrb[0].mxu0
        %v690 = vadd.f32 %v581, %v689
        %v691 = vpop.f32.mrb[0].mxu0
        %692 = vmatprep.mubr.f32.mxu0 %v531
        %693 = vmatmul.mubr.f32.gmra.mrb[0].mxu0 %v530
        %v694 = vpop.f32.mrb[0].mxu0
        %v695 = vadd.f32 %v581, %v694
        %v696 = vpop.f32.mrb[0].mxu0
        %697 = vmatprep.mubr.f32.mxu0 %v533
        %698 = vmatmul.mubr.f32.gmra.mrb[0].mxu0 %v532
        %v699 = vpop.f32.mrb[0].mxu0
        %v700 = vadd.f32 %v581, %v699
        %v701 = vpop.f32.mrb[0].mxu0
        %702 = vmatprep.mubr.f32.mxu0 %v535
        %703 = vmatmul.mubr.f32.gmra.mrb[0].mxu0 %v534
        %v704 = vpop.f32.mrb[0].mxu0
        %v705 = vadd.f32 %v581, %v704
        %v706 = vpop.f32.mrb[0].mxu0
        %707 = vmatprep.mubr.f32.mxu0 %v537
        %708 = vmatmul.mubr.f32.gmra.mrb[0].mxu0 %v536
        %v709 = vpop.f32.mrb[0].mxu0
        %v710 = vadd.f32 %v581, %v709
        %v711 = vpop.f32.mrb[0].mxu0
        %712 = vmatprep.mubr.f32.mxu0 %v539
        %713 = vmatmul.mubr.f32.gmra.mrb[0].mxu0 %v538
        %v714 = vpop.f32.mrb[0].mxu0
        %v715 = vadd.f32 %v581, %v714
        %v716 = vpop.f32.mrb[0].mxu0
        %717 = vmatprep.mubr.f32.mxu0 %v541
        %718 = vmatmul.mubr.f32.gmra.mrb[0].mxu0 %v540
        %v719 = vpop.f32.mrb[0].mxu0
        %v720 = vadd.f32 %v581, %v719
        %v721 = vpop.f32.mrb[0].mxu0
        %722 = vmatprep.mubr.f32.mxu0 %v543
        %723 = vmatmul.mubr.f32.gmra.mrb[0].mxu0 %v542
        %v724 = vpop.f32.mrb[0].mxu0
        %v725 = vadd.f32 %v581, %v724
        %v726 = vpop.f32.mrb[0].mxu0
        %727 = vdwg.mxu0
        %728 = vst [vmem:[%s230] sm:$0xff] %v650
        %729 = vst [vmem:[%s230 + $0x8] sm:$0xff] %v655
        %730 = vst [vmem:[%s230 + $0x10] sm:$0xff] %v660
        %731 = vst [vmem:[%s230 + $0x18] sm:$0xff] %v665
        %732 = vst [vmem:[%s230 + $0x20] sm:$0xff] %v670
        %733 = vst [vmem:[%s230 + $0x28] sm:$0xff] %v675
        %734 = vst [vmem:[%s230 + $0x30] sm:$0xff] %v680
        %735 = vst [vmem:[%s230 + $0x38] sm:$0xff] %v685
        %736 = vst [vmem:[%s230 + $0x40] sm:$0xff] %v690
        %737 = vst [vmem:[%s230 + $0x48] sm:$0xff] %v695
        %738 = vst [vmem:[%s230 + $0x50] sm:$0xff] %v700
        %739 = vst [vmem:[%s230 + $0x58] sm:$0xff] %v705
        %740 = vst [vmem:[%s230 + $0x60] sm:$0xff] %v710
        %741 = vst [vmem:[%s230 + $0x68] sm:$0xff] %v715
        %742 = vst [vmem:[%s230 + $0x70] sm:$0xff] %v720
        %743 = vst [vmem:[%s230 + $0x78] sm:$0xff] %v725
        %s744 = sand.u32 %s137, 1
        %s745 = scalar_lea.sflag [#allocation3], %s744
        %s746 = sand.u32 %s137, 1
        %s747 = smul.addr %s746, 128
        %s748 = scalar_lea.vmem [#allocation2], %s747
        // Predicated region
        $region41: #{tpu_custom_call.1} parent=39 // pred_check
          %p749 = pneg %p147
        $region42: #{tpu_custom_call.1} parent=39 // pred_check_branch
          %751 = sbr.rel (%p749) target = $region44
        $region43: #{tpu_custom_call.1} parent=39 // pred_region
          %s752 = smul.u32 16, %s19
          %s753 = ssub.s32 63, %s752
          %p754 = scmp.lt.s32.totalorder %s753, 16
          %s755 = scalar_select %p754, %s753, 16
          %s756 = smul.u32 128, %s755
          %s758 = ssub.s32 2048, %s756
          %759 = vsyncadd %s745, %s758
          %p760 = scmp.ne.s32.totalorder 0, %s756
          %s761 = smul.addr %s752, 128
          %s762 = scalar_lea.hbm %s5, %s761
          %s763 = smul.u32 8, %s755
          %s764 = sshll.u32 %s748, 4
          %s765 = int_to_ptr.vmem [resolvable:$true] %s764
          %s766 = sshll.u32 %s763, 4
          %770 = dma.vmem_to_hbm [thread:$0]  (%p760), %s765, %s766, %s762, %s745, 128, 128, 8
        $region44: #{tpu_custom_call.1} parent=39 // pred_fallthru
          _
      $region40: #{tpu_custom_call.1} parent=5 // pred_fallthru
        _
      %p771 = scmp.le.s32.totalorder 2, %s14
      // Predicated region
      $region45: #{tpu_custom_call.1} parent=5 // pred_check
        %p772 = pneg %p771
      $region46: #{tpu_custom_call.1} parent=5 // pred_check_branch
        %774 = sbr.rel (%p772) target = $region48
      $region47: #{tpu_custom_call.1} parent=5 // pred_region
        %s775 = ssub.s32 %s14, 2
        // Predicated region
        $region49: #{tpu_custom_call.1} parent=47 // pred_check
          %p776 = pneg %p153
        $region50: #{tpu_custom_call.1} parent=47 // pred_check_branch
          %778 = sbr.rel (%p776) target = $region52
        $region51: #{tpu_custom_call.1} parent=47 // pred_region
          %s779 = sand.u32 %s138, 1
          %s780 = scalar_lea.sflag [#allocation3], %s779
          %s781 = sand.u32 %s138, 1
          %s782 = smul.addr %s781, 128
          %s783 = scalar_lea.vmem [#allocation2], %s782
          %784 = dma.done %s780, 2048
        $region52: #{tpu_custom_call.1} parent=47 // pred_fallthru
          _
      $region48: #{tpu_custom_call.1} parent=5 // pred_fallthru
        _
    $region6: #{tpu_custom_call.1} parent=1 // loop_footer
      %s18 = sadd.s32 1, %s14
    $region7: #{tpu_custom_call.1} parent=1 // loop_footer_branch
      %13 = sbr.rel target = $region3
    $region8: #{tpu_custom_call.1} parent=1 // loop_exit
      _
    %785 = vsyncpa [#allocation3], 1
    %s786 = scalar_lea.sflag [#allocation3], 1
    %787 = vsyncpa %s786, 1

// kernel: tpu_custom_call.1
$region0: #{tpu_custom_call.1}
  #allocation0 [shape = 'u32[]', space=smem, size = 0x4, offset = 0x4, fixed_abs, tag = 'smem constant byte address 0x4 - core index']
  #allocation1 [shape = 'u32[144,128]{1,0:T(1,128)}', space=vmem, size = 0x12000, scoped, tag = 'internal scratch']
  %s0 = inlined_call_operand.vmem [shape: f32[500,96], index: 0, kind: input, shape index: {}]
  %s1 = inlined_call_operand.vmem [shape: f32[96,256], index: 1, kind: input, shape index: {}]
  %s2 = inlined_call_operand.vmem [shape: f32[1,256], index: 2, kind: input, shape index: {}]
  %s3 = inlined_call_operand.vmem [shape: f32[256,128], index: 3, kind: input, shape index: {}]
  %s4 = inlined_call_operand.vmem [shape: f32[1,128], index: 4, kind: input, shape index: {}]
  %s5 = inlined_call_operand.hbm [shape: f32[500,128], index: 5, kind: output, shape index: {}]
  %s6 = sld [smem:[#allocation0]]
  $region53: #{tpu_custom_call.1} parent=0
    _
  %s8 = ssub.s32 1, %s6
  %s9 = scalar_select 0, %s8, %s6
  $region1: #{tpu_custom_call.1} parent=0
    #allocation2 [shape = 'u8[131072]{0}', space=vmem, size = 0x20000, scoped, tag = 'output window, operand 0']
    #allocation3 [shape = 's32[2]{0}', space=sflag, size = 0x8, scoped, tag = 'scoped memory for tpu_custom_call.1']
    %10 = vsyncpa [#allocation3], 0
    %s11 = scalar_lea.sflag [#allocation3], 1
    %12 = vsyncpa %s11, 0
    loop: start=0, step=1, limit=6
    $region2: #{tpu_custom_call.1} parent=1 // loop_pre_header
      _
    $region3: #{tpu_custom_call.1} parent=1 // loop_header
      %s14 = sphi 0, %s18
      %p15 = scmp.ge.s32.totalorder %s14, 6
      %s24 = sphi 0, %s26
      %s27 = sphi 0, %s24
      %s28 = sphi 0, %s27
      %s44 = sphi 0, %s28
      %s48 = sphi 0, %s48
      %s50 = sphi 0, %s48
      %s51 = sphi 0, %s50
      %s65 = sphi 0, %s51
      %s69 = sphi 0, %s69
      %s71 = sphi 0, %s69
      %s72 = sphi 0, %s71
      %s86 = sphi 0, %s72
      %s90 = sphi 0, %s90
      %s92 = sphi 0, %s90
      %s93 = sphi 0, %s92
      %s107 = sphi 0, %s93
      %s111 = sphi 0, %s111
      %s113 = sphi 0, %s111
      %s114 = sphi 0, %s113
      %s128 = sphi 0, %s114
      %s134 = sphi 0, %s136
      %s137 = sphi 0, %s134
      %s138 = sphi 0, %s137
      %s154 = sphi 0, %s138
    $region4: #{tpu_custom_call.1} parent=1 // loop_header_branch
      %17 = sbr.rel (%p15) target = $region8
    $region5: #{tpu_custom_call.1} parent=1 // loop_body
      %s19 = ssub.s32 %s14, 1
      %s20 = ssub.s32 %s14, 2
      %s21 = sadd.s32 %s14, 1
      %s22 = ssub.s32 %s14, %s21
      %p23 = scmp.eq.s32.totalorder %s22, 0
      %s25 = sadd.s32 %s24, 1
      %s26 = scalar_select %p23, %s24, %s25
      %p29 = pneg %p23
      %p30 = scmp.eq.s32.totalorder %s14, 3
      %p31 = por %p29, %p30
      %p32 = scmp.ne.s32.totalorder %s24, %s27
      %p33 = scmp.eq.s32.totalorder %s14, 0
      %p34 = por %p32, %p33
      %p35 = scmp.ne.s32.totalorder %s24, %s27
      %p36 = scmp.eq.s32.totalorder %s19, 3
      %p37 = por %p35, %p36
      %p38 = scmp.ne.s32.totalorder %s27, %s28
      %p39 = scmp.eq.s32.totalorder %s19, 0
      %p40 = por %p38, %p39
      %p41 = scmp.ne.s32.totalorder %s27, %s28
      %p42 = scmp.eq.s32.totalorder %s20, 3
      %p43 = por %p41, %p42
      %p45 = scmp.ne.s32.totalorder %s28, %s44
      %p46 = scmp.eq.s32.totalorder %s20, 0
      %p47 = por %p45, %p46
      %s49 = sadd.s32 %s48, 1
      %p52 = scmp.eq.s32.totalorder %s14, 3
      %p53 = scmp.ne.s32.totalorder %s48, %s50
      %p54 = scmp.eq.s32.totalorder %s14, 0
      %p55 = por %p53, %p54
      %p56 = scmp.ne.s32.totalorder %s48, %s50
      %p57 = scmp.eq.s32.totalorder %s19, 3
      %p58 = por %p56, %p57
      %p59 = scmp.ne.s32.totalorder %s50, %s51
      %p60 = scmp.eq.s32.totalorder %s19, 0
      %p61 = por %p59, %p60
      %p62 = scmp.ne.s32.totalorder %s50, %s51
      %p63 = scmp.eq.s32.totalorder %s20, 3
      %p64 = por %p62, %p63
      %p66 = scmp.ne.s32.totalorder %s51, %s65
      %p67 = scmp.eq.s32.totalorder %s20, 0
      %p68 = por %p66, %p67
      %s70 = sadd.s32 %s69, 1
      %p73 = scmp.eq.s32.totalorder %s14, 3
      %p74 = scmp.ne.s32.totalorder %s69, %s71
      %p75 = scmp.eq.s32.totalorder %s14, 0
      %p76 = por %p74, %p75
      %p77 = scmp.ne.s32.totalorder %s69, %s71
      %p78 = scmp.eq.s32.totalorder %s19, 3
      %p79 = por %p77, %p78
      %p80 = scmp.ne.s32.totalorder %s71, %s72
      %p81 = scmp.eq.s32.totalorder %s19, 0
      %p82 = por %p80, %p81
      %p83 = scmp.ne.s32.totalorder %s71, %s72
      %p84 = scmp.eq.s32.totalorder %s20, 3
      %p85 = por %p83, %p84
      %p87 = scmp.ne.s32.totalorder %s72, %s86
      %p88 = scmp.eq.s32.totalorder %s20, 0
      %p89 = por %p87, %p88
      %s91 = sadd.s32 %s90, 1
      %p94 = scmp.eq.s32.totalorder %s14, 3
      %p95 = scmp.ne.s32.totalorder %s90, %s92
      %p96 = scmp.eq.s32.totalorder %s14, 0
      %p97 = por %p95, %p96
      %p98 = scmp.ne.s32.totalorder %s90, %s92
      %p99 = scmp.eq.s32.totalorder %s19, 3
      %p100 = por %p98, %p99
      %p101 = scmp.ne.s32.totalorder %s92, %s93
      %p102 = scmp.eq.s32.totalorder %s19, 0
      %p103 = por %p101, %p102
      %p104 = scmp.ne.s32.totalorder %s92, %s93
      %p105 = scmp.eq.s32.totalorder %s20, 3
      %p106 = por %p104, %p105
      %p108 = scmp.ne.s32.totalorder %s93, %s107
      %p109 = scmp.eq.s32.totalorder %s20, 0
      %p110 = por %p108, %p109
      %s112 = sadd.s32 %s111, 1
      %p115 = scmp.eq.s32.totalorder %s14, 3
      %p116 = scmp.ne.s32.totalorder %s111, %s113
      %p117 = scmp.eq.s32.totalorder %s14, 0
      %p118 = por %p116, %p117
      %p119 = scmp.ne.s32.totalorder %s111, %s113
      %p120 = scmp.eq.s32.totalorder %s19, 3
      %p121 = por %p119, %p120
      %p122 = scmp.ne.s32.totalorder %s113, %s114
      %p123 = scmp.eq.s32.totalorder %s19, 0
      %p124 = por %p122, %p123
      %p125 = scmp.ne.s32.totalorder %s113, %s114
      %p126 = scmp.eq.s32.totalorder %s20, 3
      %p127 = por %p125, %p126
      %p129 = scmp.ne.s32.totalorder %s114, %s128
      %p130 = scmp.eq.s32.totalorder %s20, 0
      %p131 = por %p129, %p130
      %s132 = ssub.s32 %s14, %s21
      %p133 = scmp.eq.s32.totalorder %s132, 0
      %s135 = sadd.s32 %s134, 1
      %s136 = scalar_select %p133, %s134, %s135
      %p139 = pneg %p133
      %p140 = scmp.eq.s32.totalorder %s14, 3
      %p141 = por %p139, %p140
      %p142 = scmp.ne.s32.totalorder %s134, %s137
      %p143 = scmp.eq.s32.totalorder %s14, 0
      %p144 = por %p142, %p143
      %p145 = scmp.ne.s32.totalorder %s134, %s137
      %p146 = scmp.eq.s32.totalorder %s19, 3
      %p147 = por %p145, %p146
      %p148 = scmp.ne.s32.totalorder %s137, %s138
      %p149 = scmp.eq.s32.totalorder %s19, 0
      %p150 = por %p148, %p149
      %p151 = scmp.ne.s32.totalorder %s137, %s138
      %p152 = scmp.eq.s32.totalorder %s20, 3
      %p153 = por %p151, %p152
      %p155 = scmp.ne.s32.totalorder %s138, %s154
      %p156 = scmp.eq.s32.totalorder %s20, 0
      %p157 = por %p155, %p156
      %p158 = scmp.le.s32.totalorder 1, %s14
      %p159 = scmp.lt.s32.totalorder %s14, 5
      %p160 = pnand %p158, %p159
      %p161 = pneg %p160
      // Predicated region
      $region9: #{tpu_custom_call.1} parent=5 // pred_check
        _
      $region10: #{tpu_custom_call.1} parent=5 // pred_check_branch
        %163 = sbr.rel (%p160) target = $region12
      $region11: #{tpu_custom_call.1} parent=5 // pred_region
        %s164 = ssub.s32 %s14, 1
        // Predicated region
        $region13: #{tpu_custom_call.1} parent=11 // pred_check
          %p165 = pneg %p61
        $region14: #{tpu_custom_call.1} parent=11 // pred_check_branch
          %167 = sbr.rel (%p165) target = $region16
        $region15: #{tpu_custom_call.1} parent=11 // pred_region
          _
        $region16: #{tpu_custom_call.1} parent=11 // pred_fallthru
          _
        // Predicated region
        $region17: #{tpu_custom_call.1} parent=11 // pred_check
          %p168 = pneg %p82
        $region18: #{tpu_custom_call.1} parent=11 // pred_check_branch
          %170 = sbr.rel (%p168) target = $region20
        $region19: #{tpu_custom_call.1} parent=11 // pred_region
          _
        $region20: #{tpu_custom_call.1} parent=11 // pred_fallthru
          _
        // Predicated region
        $region21: #{tpu_custom_call.1} parent=11 // pred_check
          %p171 = pneg %p103
        $region22: #{tpu_custom_call.1} parent=11 // pred_check_branch
          %173 = sbr.rel (%p171) target = $region24
        $region23: #{tpu_custom_call.1} parent=11 // pred_region
          _
        $region24: #{tpu_custom_call.1} parent=11 // pred_fallthru
          _
        // Predicated region
        $region25: #{tpu_custom_call.1} parent=11 // pred_check
          %p174 = pneg %p124
        $region26: #{tpu_custom_call.1} parent=11 // pred_check_branch
          %176 = sbr.rel (%p174) target = $region28
        $region27: #{tpu_custom_call.1} parent=11 // pred_region
          _
        $region28: #{tpu_custom_call.1} parent=11 // pred_fallthru
          _
      $region12: #{tpu_custom_call.1} parent=5 // pred_fallthru
        _
      %p177 = scmp.lt.s32.totalorder %s14, 4
      // Predicated region
      $region29: #{tpu_custom_call.1} parent=5 // pred_check
        %p178 = pneg %p177
      $region30: #{tpu_custom_call.1} parent=5 // pred_check_branch
        %180 = sbr.rel (%p178) target = $region32
      $region31: #{tpu_custom_call.1} parent=5 // pred_region
        // Predicated region
        $region33: #{tpu_custom_call.1} parent=31 // pred_check
          %p181 = pneg %p34
        $region34: #{tpu_custom_call.1} parent=31 // pred_check_branch
          %183 = sbr.rel (%p181) target = $region36
        $region35: #{tpu_custom_call.1} parent=31 // pred_region
          %s184 = smul.u32 16, %s14
          %s185 = ssub.s32 63, %s184
          %p186 = scmp.lt.s32.totalorder %s185, 16
          %s187 = scalar_select %p186, %s185, 16
          %s188 = smul.u32 128, %s187
          %p189 = scmp.lt.s32.totalorder %s184, 62
          %s190 = scalar_select %p189, %s184, 62
          %s191 = smul.addr %s190, 8
          %s192 = scalar_lea.vmem %s0, %s191
          %s193 = smul.u32 16, %s14
          %s194 = ssub.s32 63, %s193
          %p195 = scmp.lt.s32.totalorder %s194, 16
          %s196 = scalar_select %p195, %s194, 16
          %s197 = smul.u32 128, %s196
        $region36: #{tpu_custom_call.1} parent=31 // pred_fallthru
          _
      $region32: #{tpu_custom_call.1} parent=5 // pred_fallthru
        _
      %p198 = scmp.le.s32.totalorder 1, %s14
      %p199 = scmp.lt.s32.totalorder %s14, 5
      %p200 = pnand %p198, %p199
      %p201 = pneg %p200
      // Predicated region
      $region37: #{tpu_custom_call.1} parent=5 // pred_check
        _
      $region38: #{tpu_custom_call.1} parent=5 // pred_check_branch
        %203 = sbr.rel (%p200) target = $region40
      $region39: #{tpu_custom_call.1} parent=5 // pred_region
        %s204 = ssub.s32 %s14, 1
        %s205 = smul.u32 16, %s19
        %s206 = ssub.s32 63, %s205
        %p207 = scmp.lt.s32.totalorder %s206, 16
        %s208 = scalar_select %p207, %s206, 16
        %s209 = smul.u32 128, %s208
        %p210 = scmp.lt.s32.totalorder %s205, 62
        %s211 = scalar_select %p210, %s205, 62
        %s212 = smul.addr %s211, 8
        %s213 = scalar_lea.vmem %s0, %s212
        %p214 = pneg %p40
        %p215 = pneg %p37
        %p216 = pneg %p61
        %p217 = pneg %p58
        %p218 = pneg %p82
        %p219 = pneg %p79
        %p220 = pneg %p103
        %p221 = pneg %p100
        %p222 = pneg %p124
        %p223 = pneg %p121
        %p224 = pneg %p150
        %p225 = pneg %p147
        %s226 = sand.u32 %s137, 1
        %s227 = scalar_lea.sflag [#allocation3], %s226
        %s228 = sand.u32 %s137, 1
        %s229 = smul.addr %s228, 128
        %s230 = scalar_lea.vmem [#allocation2], %s229
        %s231 = smul.u32 16, %s19
        %s232 = ssub.s32 63, %s231
        %p233 = scmp.lt.s32.totalorder %s232, 16
        %s234 = scalar_select %p233, %s232, 16
        %s235 = smul.u32 128, %s234
        %p236 = scmp.lt.s32.totalorder %s231, 62
        %s237 = scalar_select %p236, %s231, 62
        %s238 = smul.addr %s237, 8
        %s239 = scalar_lea.vmem %s0, %s238
        %s240 = smul.u32 16, %s19
        %s241 = ssub.s32 63, %s240
        %p242 = scmp.lt.s32.totalorder %s241, 16
        %s243 = scalar_select %p242, %s241, 16
        %s244 = smul.u32 128, %s243
        %s245 = smul.u32 16, %s19
        %s246 = ssub.s32 63, %s245
        %p247 = scmp.lt.s32.totalorder %s246, 16
        %s248 = scalar_select %p247, %s246, 16
        %s249 = smul.u32 128, %s248
        %v250 = vld [vmem:[%s239] sm:$0xff]
        %v251 = vld [vmem:[%s239 + $0x8] sm:$0xff]
        %v252 = vld [vmem:[%s239 + $0x10] sm:$0xff]
        %v253 = vld [vmem:[%s239 + $0x18] sm:$0xff]
        %v254 = vld [vmem:[%s239 + $0x20] sm:$0xff]
        %v255 = vld [vmem:[%s239 + $0x28] sm:$0xff]
        %v256 = vld [vmem:[%s239 + $0x30] sm:$0xff]
        %v257 = vld [vmem:[%s239 + $0x38] sm:$0xff]
        %v258 = vld [vmem:[%s239 + $0x40] sm:$0xff]
        %v259 = vld [vmem:[%s239 + $0x48] sm:$0xff]
        %v260 = vld [vmem:[%s239 + $0x50] sm:$0xff]
        %v261 = vld [vmem:[%s239 + $0x58] sm:$0xff]
        %v262 = vld [vmem:[%s239 + $0x60] sm:$0xff]
        %v263 = vld [vmem:[%s239 + $0x68] sm:$0xff]
        %v264 = vld [vmem:[%s239 + $0x70] sm:$0xff]
        %v265 = vld [vmem:[%s239 + $0x78] sm:$0xff]
        %v266 = vld [vmem:[%s1] sm:$0xff]
        %v267 = vld [vmem:[%s1 + $0x8] sm:$0xff]
        %v268 = vld [vmem:[%s1 + $0x10] sm:$0xff]
        %v269 = vld [vmem:[%s1 + $0x18] sm:$0xff]
        %v270 = vld [vmem:[%s1 + $0x20] sm:$0xff]
        %v271 = vld [vmem:[%s1 + $0x28] sm:$0xff]
        %v272 = vld [vmem:[%s1 + $0x30] sm:$0xff]
        %v273 = vld [vmem:[%s1 + $0x38] sm:$0xff]
        %v274 = vld [vmem:[%s1 + $0x40] sm:$0xff]
        %v275 = vld [vmem:[%s1 + $0x48] sm:$0xff]
        %v276 = vld [vmem:[%s1 + $0x50] sm:$0xff]
        %v277 = vld [vmem:[%s1 + $0x58] sm:$0xff]
        %v278 = vld [vmem:[%s1 + $0x60] sm:$0xff]
        %v279 = vld [vmem:[%s1 + $0x68] sm:$0xff]
        %v280 = vld [vmem:[%s1 + $0x70] sm:$0xff]
        %v281 = vld [vmem:[%s1 + $0x78] sm:$0xff]
        %v282 = vld [vmem:[%s1 + $0x80] sm:$0xff]
        %v283 = vld [vmem:[%s1 + $0x88] sm:$0xff]
        %v284 = vld [vmem:[%s1 + $0x90] sm:$0xff]
        %v285 = vld [vmem:[%s1 + $0x98] sm:$0xff]
        %v286 = vld [vmem:[%s1 + $0xa0] sm:$0xff]
        %v287 = vld [vmem:[%s1 + $0xa8] sm:$0xff]
        %v288 = vld [vmem:[%s1 + $0xb0] sm:$0xff]
        %v289 = vld [vmem:[%s1 + $0xb8] sm:$0xff]
        %v290 = vld [vmem:[%s2] sm:$0x3]
        %v292 = vlaneseq
        %v293 = vshrl.u32 %v292, 7
        %v294 = vsub.s32 0, %v293
        %v295 = vrot.slane %v290, %v294
        %v296 = vlaneseq
        %v297 = vshrl.u32 %v296, 7
        %v298 = vsub.s32 1, %v297
        %v299 = vrot.slane %v290, %v298
        %vm302 = vcmask 785408
        %v304 = vsel %vm302, %v250, 0
        %v307 = vsel %vm302, %v251, 0
        %v310 = vsel %vm302, %v252, 0
        %v313 = vsel %vm302, %v253, 0
        %v316 = vsel %vm302, %v254, 0
        %v319 = vsel %vm302, %v255, 0
        %v322 = vsel %vm302, %v256, 0
        %v325 = vsel %vm302, %v257, 0
        %v328 = vsel %vm302, %v258, 0
        %v331 = vsel %vm302, %v259, 0
        %v334 = vsel %vm302, %v260, 0
        %v337 = vsel %vm302, %v261, 0
        %v340 = vsel %vm302, %v262, 0
        %v343 = vsel %vm302, %v263, 0
        %v346 = vsel %vm302, %v264, 0
        %v349 = vsel %vm302, %v265, 0
        %351 = vmatprep.subr.mxu0 %v267
        %352 = vmatpush1.msra.mxu0 %v266
        %353 = vmatprep.subr.mxu0 %v269
        %354 = vmatpush1.msra.mxu0 %v268
        %355 = vmatprep.subr.mxu0 %v271
        %356 = vmatpush1.msra.mxu0 %v270
        %357 = vmatprep.subr.mxu0 %v273
        %358 = vmatpush1.msra.mxu0 %v272
        %359 = vmatprep.subr.mxu0 %v275
        %360 = vmatpush1.msra.mxu0 %v274
        %361 = vmatprep.subr.mxu0 %v277
        %362 = vmatpush1.msra.mxu0 %v276
        %363 = vmatprep.subr.mxu0 %v279
        %364 = vmatpush1.msra.mxu0 %v278
        %365 = vmatprep.subr.mxu0 %v281
        %366 = vmatpush1.msra.mxu0 %v280
        %367 = vmatprep.subr.mxu0 %v283
        %368 = vmatpush1.msra.mxu0 %v282
        %369 = vmatprep.subr.mxu0 %v285
        %370 = vmatpush1.msra.mxu0 %v284
        %371 = vmatprep.subr.mxu0 %v287
        %372 = vmatpush1.msra.mxu0 %v286
        %373 = vmatprep.subr.mxu0 %v289
        %374 = vmatpush1.msra.mxu0 %v288
        %375 = vmatprep.subr.mxu0 0.0
        %376 = vmatpush1.msra.mxu0 0.0
        %377 = vmatprep.subr.mxu0 0.0
        %378 = vmatpush1.msra.mxu0 0.0
        %379 = vmatprep.subr.mxu0 0.0
        %380 = vmatpush1.msra.mxu0 0.0
        %381 = vmatprep.subr.mxu0 0.0
        %382 = vmatpush1.msra.mxu0 0.0
        %383 = vmatprep.subr.mxu0 0.0
        %384 = vmatpush1.msra.mxu0 0.0
        %385 = vmatprep.subr.mxu0 0.0
        %386 = vmatpush1.msra.mxu0 0.0
        %387 = vmatprep.subr.mxu0 0.0
        %388 = vmatpush1.msra.mxu0 0.0
        %389 = vmatprep.subr.mxu0 0.0
        %390 = vmatpush1.msra.mxu0 0.0
        %391 = vmatprep.subr.mxu0 0.0
        %392 = vmatpush1.msra.mxu0 0.0
        %393 = vmatprep.subr.mxu0 0.0
        %394 = vmatpush1.msra.mxu0 0.0
        %395 = vmatprep.subr.mxu0 0.0
        %396 = vmatpush1.msra.mxu0 0.0
        %397 = vmatprep.subr.mxu0 0.0
        %398 = vmatpush1.msra.mxu0 0.0
        %399 = vmatprep.subr.mxu0 0.0
        %400 = vmatpush1.msra.mxu0 0.0
        %401 = vmatprep.subr.mxu0 0.0
        %402 = vmatpush1.msra.mxu0 0.0
        %403 = vmatprep.subr.mxu0 0.0
        %404 = vmatpush1.msra.mxu0 0.0
        %405 = vmatprep.subr.mxu0 0.0
        %406 = vmatpush1.msra.mxu0 0.0
        %407 = vmatprep.subr.mxu0 0.0
        %408 = vmatpush1.msra.mxu0 0.0
        %409 = vmatprep.subr.mxu0 0.0
        %410 = vmatpush1.msra.mxu0 0.0
        %411 = vmatprep.subr.mxu0 0.0
        %412 = vmatpush1.msra.mxu0 0.0
        %413 = vmatprep.subr.mxu0 0.0
        %414 = vmatpush1.msra.mxu0 0.0
        %415 = vmatprep.mubr.f32.mxu0 0.0
        %416 = vmatmul.mubr.f32.gmra.mrb[0].mxu0 %v304
        %v417 = vpop.f32.mrb[0].mxu0
        %v418 = vadd.f32 %v295, %v417
        %v419 = vpop.f32.mrb[0].mxu0
        %v420 = vadd.f32 %v299, %v419
        %421 = vmatprep.mubr.f32.mxu0 0.0
        %422 = vmatmul.mubr.f32.gmra.mrb[0].mxu0 %v307
        %v423 = vpop.f32.mrb[0].mxu0
        %v424 = vadd.f32 %v295, %v423
        %v425 = vpop.f32.mrb[0].mxu0
        %v426 = vadd.f32 %v299, %v425
        %427 = vmatprep.mubr.f32.mxu0 0.0
        %428 = vmatmul.mubr.f32.gmra.mrb[0].mxu0 %v310
        %v429 = vpop.f32.mrb[0].mxu0
        %v430 = vadd.f32 %v295, %v429
        %v431 = vpop.f32.mrb[0].mxu0
        %v432 = vadd.f32 %v299, %v431
        %433 = vmatprep.mubr.f32.mxu0 0.0
        %434 = vmatmul.mubr.f32.gmra.mrb[0].mxu0 %v313
        %v435 = vpop.f32.mrb[0].mxu0
        %v436 = vadd.f32 %v295, %v435
        %v437 = vpop.f32.mrb[0].mxu0
        %v438 = vadd.f32 %v299, %v437
        %439 = vmatprep.mubr.f32.mxu0 0.0
        %440 = vmatmul.mubr.f32.gmra.mrb[0].mxu0 %v316
        %v441 = vpop.f32.mrb[0].mxu0
        %v442 = vadd.f32 %v295, %v441
        %v443 = vpop.f32.mrb[0].mxu0
        %v444 = vadd.f32 %v299, %v443
        %445 = vmatprep.mubr.f32.mxu0 0.0
        %446 = vmatmul.mubr.f32.gmra.mrb[0].mxu0 %v319
        %v447 = vpop.f32.mrb[0].mxu0
        %v448 = vadd.f32 %v295, %v447
        %v449 = vpop.f32.mrb[0].mxu0
        %v450 = vadd.f32 %v299, %v449
        %451 = vmatprep.mubr.f32.mxu0 0.0
        %452 = vmatmul.mubr.f32.gmra.mrb[0].mxu0 %v322
        %v453 = vpop.f32.mrb[0].mxu0
        %v454 = vadd.f32 %v295, %v453
        %v455 = vpop.f32.mrb[0].mxu0
        %v456 = vadd.f32 %v299, %v455
        %457 = vmatprep.mubr.f32.mxu0 0.0
        %458 = vmatmul.mubr.f32.gmra.mrb[0].mxu0 %v325
        %v459 = vpop.f32.mrb[0].mxu0
        %v460 = vadd.f32 %v295, %v459
        %v461 = vpop.f32.mrb[0].mxu0
        %v462 = vadd.f32 %v299, %v461
        %463 = vmatprep.mubr.f32.mxu0 0.0
        %464 = vmatmul.mubr.f32.gmra.mrb[0].mxu0 %v328
        %v465 = vpop.f32.mrb[0].mxu0
        %v466 = vadd.f32 %v295, %v465
        %v467 = vpop.f32.mrb[0].mxu0
        %v468 = vadd.f32 %v299, %v467
        %469 = vmatprep.mubr.f32.mxu0 0.0
        %470 = vmatmul.mubr.f32.gmra.mrb[0].mxu0 %v331
        %v471 = vpop.f32.mrb[0].mxu0
        %v472 = vadd.f32 %v295, %v471
        %v473 = vpop.f32.mrb[0].mxu0
        %v474 = vadd.f32 %v299, %v473
        %475 = vmatprep.mubr.f32.mxu0 0.0
        %476 = vmatmul.mubr.f32.gmra.mrb[0].mxu0 %v334
        %v477 = vpop.f32.mrb[0].mxu0
        %v478 = vadd.f32 %v295, %v477
        %v479 = vpop.f32.mrb[0].mxu0
        %v480 = vadd.f32 %v299, %v479
        %481 = vmatprep.mubr.f32.mxu0 0.0
        %482 = vmatmul.mubr.f32.gmra.mrb[0].mxu0 %v337
        %v483 = vpop.f32.mrb[0].mxu0
        %v484 = vadd.f32 %v295, %v483
        %v485 = vpop.f32.mrb[0].mxu0
        %v486 = vadd.f32 %v299, %v485
        %487 = vmatprep.mubr.f32.mxu0 0.0
        %488 = vmatmul.mubr.f32.gmra.mrb[0].mxu0 %v340
        %v489 = vpop.f32.mrb[0].mxu0
        %v490 = vadd.f32 %v295, %v489
        %v491 = vpop.f32.mrb[0].mxu0
        %v492 = vadd.f32 %v299, %v491
        %493 = vmatprep.mubr.f32.mxu0 0.0
        %494 = vmatmul.mubr.f32.gmra.mrb[0].mxu0 %v343
        %v495 = vpop.f32.mrb[0].mxu0
        %v496 = vadd.f32 %v295, %v495
        %v497 = vpop.f32.mrb[0].mxu0
        %v498 = vadd.f32 %v299, %v497
        %499 = vmatprep.mubr.f32.mxu0 0.0
        %500 = vmatmul.mubr.f32.gmra.mrb[0].mxu0 %v346
        %v501 = vpop.f32.mrb[0].mxu0
        %v502 = vadd.f32 %v295, %v501
        %v503 = vpop.f32.mrb[0].mxu0
        %v504 = vadd.f32 %v299, %v503
        %505 = vmatprep.mubr.f32.mxu0 0.0
        %506 = vmatmul.mubr.f32.gmra.mrb[0].mxu0 %v349
        %v507 = vpop.f32.mrb[0].mxu0
        %v508 = vadd.f32 %v295, %v507
        %v509 = vpop.f32.mrb[0].mxu0
        %v510 = vadd.f32 %v299, %v509
        %511 = vdwg.mxu0
        %v512 = vmax.f32 %v418, 0.0
        %v513 = vmax.f32 %v420, 0.0
        %v514 = vmax.f32 %v424, 0.0
        %v515 = vmax.f32 %v426, 0.0
        %v516 = vmax.f32 %v430, 0.0
        %v517 = vmax.f32 %v432, 0.0
        %v518 = vmax.f32 %v436, 0.0
        %v519 = vmax.f32 %v438, 0.0
        %v520 = vmax.f32 %v442, 0.0
        %v521 = vmax.f32 %v444, 0.0
        %v522 = vmax.f32 %v448, 0.0
        %v523 = vmax.f32 %v450, 0.0
        %v524 = vmax.f32 %v454, 0.0
        %v525 = vmax.f32 %v456, 0.0
        %v526 = vmax.f32 %v460, 0.0
        %v527 = vmax.f32 %v462, 0.0
        %v528 = vmax.f32 %v466, 0.0
        %v529 = vmax.f32 %v468, 0.0
        %v530 = vmax.f32 %v472, 0.0
        %v531 = vmax.f32 %v474, 0.0
        %v532 = vmax.f32 %v478, 0.0
        %v533 = vmax.f32 %v480, 0.0
        %v534 = vmax.f32 %v484, 0.0
        %v535 = vmax.f32 %v486, 0.0
        %v536 = vmax.f32 %v490, 0.0
        %v537 = vmax.f32 %v492, 0.0
        %v538 = vmax.f32 %v496, 0.0
        %v539 = vmax.f32 %v498, 0.0
        %v540 = vmax.f32 %v502, 0.0
        %v541 = vmax.f32 %v504, 0.0
        %v542 = vmax.f32 %v508, 0.0
        %v543 = vmax.f32 %v510, 0.0
        %v544 = vld [vmem:[%s3] sm:$0xff]
        %v545 = vld [vmem:[%s3 + $0x8] sm:$0xff]
        %v546 = vld [vmem:[%s3 + $0x10] sm:$0xff]
        %v547 = vld [vmem:[%s3 + $0x18] sm:$0xff]
        %v548 = vld [vmem:[%s3 + $0x20] sm:$0xff]
        %v549 = vld [vmem:[%s3 + $0x28] sm:$0xff]
        %v550 = vld [vmem:[%s3 + $0x30] sm:$0xff]
        %v551 = vld [vmem:[%s3 + $0x38] sm:$0xff]
        %v552 = vld [vmem:[%s3 + $0x40] sm:$0xff]
        %v553 = vld [vmem:[%s3 + $0x48] sm:$0xff]
        %v554 = vld [vmem:[%s3 + $0x50] sm:$0xff]
        %v555 = vld [vmem:[%s3 + $0x58] sm:$0xff]
        %v556 = vld [vmem:[%s3 + $0x60] sm:$0xff]
        %v557 = vld [vmem:[%s3 + $0x68] sm:$0xff]
        %v558 = vld [vmem:[%s3 + $0x70] sm:$0xff]
        %v559 = vld [vmem:[%s3 + $0x78] sm:$0xff]
        %v560 = vld [vmem:[%s3 + $0x80] sm:$0xff]
        %v561 = vld [vmem:[%s3 + $0x88] sm:$0xff]
        %v562 = vld [vmem:[%s3 + $0x90] sm:$0xff]
        %v563 = vld [vmem:[%s3 + $0x98] sm:$0xff]
        %v564 = vld [vmem:[%s3 + $0xa0] sm:$0xff]
        %v565 = vld [vmem:[%s3 + $0xa8] sm:$0xff]
        %v566 = vld [vmem:[%s3 + $0xb0] sm:$0xff]
        %v567 = vld [vmem:[%s3 + $0xb8] sm:$0xff]
        %v568 = vld [vmem:[%s3 + $0xc0] sm:$0xff]
        %v569 = vld [vmem:[%s3 + $0xc8] sm:$0xff]
        %v570 = vld [vmem:[%s3 + $0xd0] sm:$0xff]
        %v571 = vld [vmem:[%s3 + $0xd8] sm:$0xff]
        %v572 = vld [vmem:[%s3 + $0xe0] sm:$0xff]
        %v573 = vld [vmem:[%s3 + $0xe8] sm:$0xff]
        %v574 = vld [vmem:[%s3 + $0xf0] sm:$0xff]
        %v575 = vld [vmem:[%s3 + $0xf8] sm:$0xff]
        %v576 = vld [vmem:[%s4] sm:$0x1]
        %v578 = vlaneseq
        %v579 = vshrl.u32 %v578, 7
        %v580 = vsub.s32 0, %v579
        %v581 = vrot.slane %v576, %v580
        %583 = vmatprep.subr.mxu0 0.0
        %584 = vmatpush1.msra.mxu0 %v544
        %585 = vmatprep.subr.mxu0 0.0
        %586 = vmatpush1.msra.mxu0 %v545
        %587 = vmatprep.subr.mxu0 0.0
        %588 = vmatpush1.msra.mxu0 %v546
        %589 = vmatprep.subr.mxu0 0.0
        %590 = vmatpush1.msra.mxu0 %v547
        %591 = vmatprep.subr.mxu0 0.0
        %592 = vmatpush1.msra.mxu0 %v548
        %593 = vmatprep.subr.mxu0 0.0
        %594 = vmatpush1.msra.mxu0 %v549
        %595 = vmatprep.subr.mxu0 0.0
        %596 = vmatpush1.msra.mxu0 %v550
        %597 = vmatprep.subr.mxu0 0.0
        %598 = vmatpush1.msra.mxu0 %v551
        %599 = vmatprep.subr.mxu0 0.0
        %600 = vmatpush1.msra.mxu0 %v552
        %601 = vmatprep.subr.mxu0 0.0
        %602 = vmatpush1.msra.mxu0 %v553
        %603 = vmatprep.subr.mxu0 0.0
        %604 = vmatpush1.msra.mxu0 %v554
        %605 = vmatprep.subr.mxu0 0.0
        %606 = vmatpush1.msra.mxu0 %v555
        %607 = vmatprep.subr.mxu0 0.0
        %608 = vmatpush1.msra.mxu0 %v556
        %609 = vmatprep.subr.mxu0 0.0
        %610 = vmatpush1.msra.mxu0 %v557
        %611 = vmatprep.subr.mxu0 0.0
        %612 = vmatpush1.msra.mxu0 %v558
        %613 = vmatprep.subr.mxu0 0.0
        %614 = vmatpush1.msra.mxu0 %v559
        %615 = vmatprep.subr.mxu0 0.0
        %616 = vmatpush1.msra.mxu0 %v560
        %617 = vmatprep.subr.mxu0 0.0
        %618 = vmatpush1.msra.mxu0 %v561
        %619 = vmatprep.subr.mxu0 0.0
        %620 = vmatpush1.msra.mxu0 %v562
        %621 = vmatprep.subr.mxu0 0.0
        %622 = vmatpush1.msra.mxu0 %v563
        %623 = vmatprep.subr.mxu0 0.0
        %624 = vmatpush1.msra.mxu0 %v564
        %625 = vmatprep.subr.mxu0 0.0
        %626 = vmatpush1.msra.mxu0 %v565
        %627 = vmatprep.subr.mxu0 0.0
        %628 = vmatpush1.msra.mxu0 %v566
        %629 = vmatprep.subr.mxu0 0.0
        %630 = vmatpush1.msra.mxu0 %v567
        %631 = vmatprep.subr.mxu0 0.0
        %632 = vmatpush1.msra.mxu0 %v568
        %633 = vmatprep.subr.mxu0 0.0
        %634 = vmatpush1.msra.mxu0 %v569
        %635 = vmatprep.subr.mxu0 0.0
        %636 = vmatpush1.msra.mxu0 %v570
        %637 = vmatprep.subr.mxu0 0.0
        %638 = vmatpush1.msra.mxu0 %v571
        %639 = vmatprep.subr.mxu0 0.0
        %640 = vmatpush1.msra.mxu0 %v572
        %641 = vmatprep.subr.mxu0 0.0
        %642 = vmatpush1.msra.mxu0 %v573
        %643 = vmatprep.subr.mxu0 0.0
        %644 = vmatpush1.msra.mxu0 %v574
        %645 = vmatprep.subr.mxu0 0.0
        %646 = vmatpush1.msra.mxu0 %v575
        %647 = vmatprep.mubr.f32.mxu0 %v513
        %648 = vmatmul.mubr.f32.gmra.mrb[0].mxu0 %v512
        %v649 = vpop.f32.mrb[0].mxu0
        %v650 = vadd.f32 %v581, %v649
        %v651 = vpop.f32.mrb[0].mxu0
        %652 = vmatprep.mubr.f32.mxu0 %v515
        %653 = vmatmul.mubr.f32.gmra.mrb[0].mxu0 %v514
        %v654 = vpop.f32.mrb[0].mxu0
        %v655 = vadd.f32 %v581, %v654
        %v656 = vpop.f32.mrb[0].mxu0
        %657 = vmatprep.mubr.f32.mxu0 %v517
        %658 = vmatmul.mubr.f32.gmra.mrb[0].mxu0 %v516
        %v659 = vpop.f32.mrb[0].mxu0
        %v660 = vadd.f32 %v581, %v659
        %v661 = vpop.f32.mrb[0].mxu0
        %662 = vmatprep.mubr.f32.mxu0 %v519
        %663 = vmatmul.mubr.f32.gmra.mrb[0].mxu0 %v518
        %v664 = vpop.f32.mrb[0].mxu0
        %v665 = vadd.f32 %v581, %v664
        %v666 = vpop.f32.mrb[0].mxu0
        %667 = vmatprep.mubr.f32.mxu0 %v521
        %668 = vmatmul.mubr.f32.gmra.mrb[0].mxu0 %v520
        %v669 = vpop.f32.mrb[0].mxu0
        %v670 = vadd.f32 %v581, %v669
        %v671 = vpop.f32.mrb[0].mxu0
        %672 = vmatprep.mubr.f32.mxu0 %v523
        %673 = vmatmul.mubr.f32.gmra.mrb[0].mxu0 %v522
        %v674 = vpop.f32.mrb[0].mxu0
        %v675 = vadd.f32 %v581, %v674
        %v676 = vpop.f32.mrb[0].mxu0
        %677 = vmatprep.mubr.f32.mxu0 %v525
        %678 = vmatmul.mubr.f32.gmra.mrb[0].mxu0 %v524
        %v679 = vpop.f32.mrb[0].mxu0
        %v680 = vadd.f32 %v581, %v679
        %v681 = vpop.f32.mrb[0].mxu0
        %682 = vmatprep.mubr.f32.mxu0 %v527
        %683 = vmatmul.mubr.f32.gmra.mrb[0].mxu0 %v526
        %v684 = vpop.f32.mrb[0].mxu0
        %v685 = vadd.f32 %v581, %v684
        %v686 = vpop.f32.mrb[0].mxu0
        %687 = vmatprep.mubr.f32.mxu0 %v529
        %688 = vmatmul.mubr.f32.gmra.mrb[0].mxu0 %v528
        %v689 = vpop.f32.mrb[0].mxu0
        %v690 = vadd.f32 %v581, %v689
        %v691 = vpop.f32.mrb[0].mxu0
        %692 = vmatprep.mubr.f32.mxu0 %v531
        %693 = vmatmul.mubr.f32.gmra.mrb[0].mxu0 %v530
        %v694 = vpop.f32.mrb[0].mxu0
        %v695 = vadd.f32 %v581, %v694
        %v696 = vpop.f32.mrb[0].mxu0
        %697 = vmatprep.mubr.f32.mxu0 %v533
        %698 = vmatmul.mubr.f32.gmra.mrb[0].mxu0 %v532
        %v699 = vpop.f32.mrb[0].mxu0
        %v700 = vadd.f32 %v581, %v699
        %v701 = vpop.f32.mrb[0].mxu0
        %702 = vmatprep.mubr.f32.mxu0 %v535
        %703 = vmatmul.mubr.f32.gmra.mrb[0].mxu0 %v534
        %v704 = vpop.f32.mrb[0].mxu0
        %v705 = vadd.f32 %v581, %v704
        %v706 = vpop.f32.mrb[0].mxu0
        %707 = vmatprep.mubr.f32.mxu0 %v537
        %708 = vmatmul.mubr.f32.gmra.mrb[0].mxu0 %v536
        %v709 = vpop.f32.mrb[0].mxu0
        %v710 = vadd.f32 %v581, %v709
        %v711 = vpop.f32.mrb[0].mxu0
        %712 = vmatprep.mubr.f32.mxu0 %v539
        %713 = vmatmul.mubr.f32.gmra.mrb[0].mxu0 %v538
        %v714 = vpop.f32.mrb[0].mxu0
        %v715 = vadd.f32 %v581, %v714
        %v716 = vpop.f32.mrb[0].mxu0
        %717 = vmatprep.mubr.f32.mxu0 %v541
        %718 = vmatmul.mubr.f32.gmra.mrb[0].mxu0 %v540
        %v719 = vpop.f32.mrb[0].mxu0
        %v720 = vadd.f32 %v581, %v719
        %v721 = vpop.f32.mrb[0].mxu0
        %722 = vmatprep.mubr.f32.mxu0 %v543
        %723 = vmatmul.mubr.f32.gmra.mrb[0].mxu0 %v542
        %v724 = vpop.f32.mrb[0].mxu0
        %v725 = vadd.f32 %v581, %v724
        %v726 = vpop.f32.mrb[0].mxu0
        %727 = vdwg.mxu0
        %728 = vst [vmem:[%s230] sm:$0xff] %v650
        %729 = vst [vmem:[%s230 + $0x8] sm:$0xff] %v655
        %730 = vst [vmem:[%s230 + $0x10] sm:$0xff] %v660
        %731 = vst [vmem:[%s230 + $0x18] sm:$0xff] %v665
        %732 = vst [vmem:[%s230 + $0x20] sm:$0xff] %v670
        %733 = vst [vmem:[%s230 + $0x28] sm:$0xff] %v675
        %734 = vst [vmem:[%s230 + $0x30] sm:$0xff] %v680
        %735 = vst [vmem:[%s230 + $0x38] sm:$0xff] %v685
        %736 = vst [vmem:[%s230 + $0x40] sm:$0xff] %v690
        %737 = vst [vmem:[%s230 + $0x48] sm:$0xff] %v695
        %738 = vst [vmem:[%s230 + $0x50] sm:$0xff] %v700
        %739 = vst [vmem:[%s230 + $0x58] sm:$0xff] %v705
        %740 = vst [vmem:[%s230 + $0x60] sm:$0xff] %v710
        %741 = vst [vmem:[%s230 + $0x68] sm:$0xff] %v715
        %742 = vst [vmem:[%s230 + $0x70] sm:$0xff] %v720
        %743 = vst [vmem:[%s230 + $0x78] sm:$0xff] %v725
        %s744 = sand.u32 %s137, 1
        %s745 = scalar_lea.sflag [#allocation3], %s744
        %s746 = sand.u32 %s137, 1
        %s747 = smul.addr %s746, 128
        %s748 = scalar_lea.vmem [#allocation2], %s747
        // Predicated region
        $region41: #{tpu_custom_call.1} parent=39 // pred_check
          %p749 = pneg %p147
        $region42: #{tpu_custom_call.1} parent=39 // pred_check_branch
          %751 = sbr.rel (%p749) target = $region44
        $region43: #{tpu_custom_call.1} parent=39 // pred_region
          %s752 = smul.u32 16, %s19
          %s753 = ssub.s32 63, %s752
          %p754 = scmp.lt.s32.totalorder %s753, 16
          %s755 = scalar_select %p754, %s753, 16
          %s756 = smul.u32 128, %s755
          %s758 = ssub.s32 2048, %s756
          %759 = vsyncadd %s745, %s758
          %p760 = scmp.ne.s32.totalorder 0, %s756
          %s761 = smul.addr %s752, 128
          %s762 = scalar_lea.hbm %s5, %s761
          %s763 = smul.u32 8, %s755
          %s764 = sshll.u32 %s748, 4
          %s765 = int_to_ptr.vmem [resolvable:$true] %s764
          %s766 = sshll.u32 %s763, 4
          %770 = dma.vmem_to_hbm [thread:$0]  (%p760), %s765, %s766, %s762, %s745, 128, 128, 8
        $region44: #{tpu_custom_call.1} parent=39 // pred_fallthru
          _
      $region40: #{tpu_custom_call.1} parent=5 // pred_fallthru
        _
      %p771 = scmp.le.s32.totalorder 2, %s14
      // Predicated region
      $region45: #{tpu_custom_call.1} parent=5 // pred_check
        %p772 = pneg %p771
      $region46: #{tpu_custom_call.1} parent=5 // pred_check_branch
        %774 = sbr.rel (%p772) target = $region48
      $region47: #{tpu_custom_call.1} parent=5 // pred_region
        %s775 = ssub.s32 %s14, 2
        // Predicated region
        $region49: #{tpu_custom_call.1} parent=47 // pred_check
          %p776 = pneg %p153
        $region50: #{tpu_custom_call.1} parent=47 // pred_check_branch
          %778 = sbr.rel (%p776) target = $region52
        $region51: #{tpu_custom_call.1} parent=47 // pred_region
          %s779 = sand.u32 %s138, 1
          %s780 = scalar_lea.sflag [#allocation3], %s779
          %s781 = sand.u32 %s138, 1
          %s782 = smul.addr %s781, 128
          %s783 = scalar_lea.vmem [#allocation2], %s782
          %784 = dma.done %s780, 2048
        $region52: #{tpu_custom_call.1} parent=47 // pred_fallthru
          _
      $region48: #{tpu_custom_call.1} parent=5 // pred_fallthru
        _
    $region6: #{tpu_custom_call.1} parent=1 // loop_footer
      %s18 = sadd.s32 1, %s14
    $region7: #{tpu_custom_call.1} parent=1 // loop_footer_branch
      %13 = sbr.rel target = $region3
    $region8: #{tpu_custom_call.1} parent=1 // loop_exit
      _
    %785 = vsyncpa [#allocation3], 1
    %s786 = scalar_lea.sflag [#allocation3], 1
    %787 = vsyncpa %s786, 1

</llo_original>
